<compile_context>
chip_gen: v5e
topology: v5e:2x2
jax: 0.10.0
libtpu: 0.0.40
codegen_flags: <defaults>
</compile_context>

<pallas_src>
import jax
import jax.numpy as jnp
from jax.experimental import pallas as pl
from jax.experimental.pallas import tpu as pltpu

_LANE = 128
_SUBLANE = 8


def _round_up(x, m):
    return ((x + m - 1) // m) * m


def _vmem_cap_bytes():
    """Generation-aware usable VMEM budget (~0.75x physical per TensorCore)."""
    phys = 64 << 20  # conservative fallback = v7x per-core VMEM
    try:
        phys = int(pltpu.get_tpu_info().vmem_capacity_bytes)
    except Exception:
        pass
    return (phys * 3) // 4


def _pick_key_tile(S, max_kt=512):
    """Largest divisor of S that is <= max_kt (S itself if it already fits)."""
    if S <= max_kt:
        return S
    best = 1
    for kt in range(1, max_kt + 1):
        if S % kt == 0:
            best = kt
    return best


def _footprint_bytes(TB, S, D, F, KT, weight_itemsize):
    """Conservative per-grid-step VMEM footprint using Mosaic-padded shapes."""
    Dp = _round_up(D, _LANE)
    Fp = _round_up(F, _LANE)
    KTp = _round_up(KT, _LANE)
    Sp = _round_up(S, _SUBLANE)
    rows = _round_up(TB * S, _SUBLANE)
    # weights single-buffered; (1, N) vectors pad to 8 sublanes
    weights = (3 * Dp * Dp + 2 * Dp * Fp) * weight_itemsize \
        + (7 * Dp + Fp) * _SUBLANE * 4
    # src + out tiles, double-buffered by the pipeline, f32
    tiles = 2 * (2 * TB * Sp * Dp * 4)
    # f32 temporaries (x, q, k, v, attn, h, ffn, y, per-tile scores)
    # + bf16 copies feeding the MXU
    interm = rows * ((8 * Dp + Fp + KTp) * 4 + (5 * Dp + Fp + KTp) * 2)
    return weights + tiles + interm


def _pick_batch_tile(B, S, D, F, KT, weight_itemsize, budget):
    divisors = [d for d in range(B, 0, -1) if B % d == 0]
    # First pass insists on >= 2 grid steps when B > 1 (v7x megacore); second relaxes.
    for want_two_steps in (True, False):
        for tb in divisors:
            if want_two_steps and B > 1 and B // tb < 2:
                continue
            if _footprint_bytes(tb, S, D, F, KT, weight_itemsize) <= budget:
                return tb
    return 1


def _layernorm(z, gamma, beta, eps=1e-5):
    mu = jnp.mean(z, axis=-1, keepdims=True)
    d = z - mu
    var = jnp.mean(d * d, axis=-1, keepdims=True)
    return d * jax.lax.rsqrt(var + eps) * gamma + beta


def _make_encoder_kernel(TB, S, D, F, KT, mxu_dtype):
    n_kv = S // KT

    def kernel(src_ref,
               wq_ref, bq_ref, wk_ref, bk_ref, wv_ref, bv_ref,
               g1_ref, be1_ref,
               w1_ref, b1_ref, w2_ref, b2_ref,
               g2_ref, be2_ref,
               out_ref):
        x2 = src_ref[...].astype(jnp.float32).reshape(TB * S, D)
        xm = x2.astype(mxu_dtype)

        # --- LinearAttention: Q/K/V projections on the flattened (TB*S, D) slab ---
        q = jnp.dot(xm, wq_ref[...], preferred_element_type=jnp.float32) + bq_ref[...]
        k = jnp.dot(xm, wk_ref[...], preferred_element_type=jnp.float32) + bk_ref[...]
        v = jnp.dot(xm, wv_ref[...], preferred_element_type=jnp.float32) + bv_ref[...]

        q3 = q.reshape(TB, S, D).astype(mxu_dtype)
        k3 = k.reshape(TB, S, D).astype(mxu_dtype)
        v3 = v.reshape(TB, S, D).astype(mxu_dtype)

        # relu(Q K^T) @ V accumulated over key blocks (VMEM linear in S).
        # Contractions are on the last dim of both operands -> no transposes.
        attn = jnp.zeros((TB, S, D), jnp.float32)
        for t in range(n_kv):
            k_blk = k3[:, t * KT:(t + 1) * KT, :]
            v_blk = v3[:, t * KT:(t + 1) * KT, :]
            s_blk = jnp.maximum(
                jnp.einsum("bsd,btd->bst", q3, k_blk,
                           preferred_element_type=jnp.float32), 0.0)
            attn = attn + jnp.einsum("bst,btd->bsd", s_blk.astype(mxu_dtype), v_blk,
                                     preferred_element_type=jnp.float32)

        # --- residual + LayerNorm 1 (dropout p=0 -> identity) ---
        h = _layernorm(x2 + attn.reshape(TB * S, D), g1_ref[...], be1_ref[...])

        # --- feedforward: Linear -> ReLU -> Linear ---
        f = jnp.maximum(
            jnp.dot(h.astype(mxu_dtype), w1_ref[...],
                    preferred_element_type=jnp.float32) + b1_ref[...], 0.0)
        f = jnp.dot(f.astype(mxu_dtype), w2_ref[...],
                    preferred_element_type=jnp.float32) + b2_ref[...]

        # --- residual + LayerNorm 2 ---
        y = _layernorm(h + f, g2_ref[...], be2_ref[...])
        out_ref[...] = y.reshape(TB, S, D).astype(out_ref.dtype)

    return kernel


def custom_encoder_layer(src, params, *, mxu_dtype=jnp.bfloat16, out_dtype=None,
                         batch_tile=None):
    """src: (B, S, D).  params: dict of pre-transposed (in_features, out_features)
    weights and (1, N) biases / LayerNorm affine params, all at natural shapes."""
    B, S, D = src.shape
    F = params["w1"].shape[1]
    out_dtype = src.dtype if out_dtype is None else out_dtype

    f32 = jnp.float32
    # Weights -> mxu_dtype (halves VMEM/HBM bytes for bf16); biases / affine stay f32.
    wq = params["wq"].astype(mxu_dtype)
    wk = params["wk"].astype(mxu_dtype)
    wv = params["wv"].astype(mxu_dtype)
    w1 = params["w1"].astype(mxu_dtype)
    w2 = params["w2"].astype(mxu_dtype)
    bq = params["bq"].astype(f32)
    bk = params["bk"].astype(f32)
    bv = params["bv"].astype(f32)
    b1 = params["b1"].astype(f32)
    b2 = params["b2"].astype(f32)
    g1 = params["gamma1"].astype(f32)
    be1 = params["beta1"].astype(f32)
    g2 = params["gamma2"].astype(f32)
    be2 = params["beta2"].astype(f32)

    KT = _pick_key_tile(S)
    itm_w = jnp.dtype(mxu_dtype).itemsize
    cap = _vmem_cap_bytes()

    if batch_tile is None:
        TB = _pick_batch_tile(B, S, D, F, KT, itm_w, cap)
    else:
        TB = batch_tile
        assert B % TB == 0, "batch_tile must divide batch"

    footprint = _footprint_bytes(TB, S, D, F, KT, itm_w)
    vmem_limit = int(min(cap, max(32 << 20, (footprint * 5) // 4)))

    kernel = _make_encoder_kernel(TB, S, D, F, KT, mxu_dtype)
    args = (src, wq, bq, wk, bk, wv, bv, g1, be1, w1, b1, w2, b2, g2, be2)

    def _call(single_buffer_weights):
        def const_spec(shape):
            idx = lambda b: (0,) * len(shape)
            if single_buffer_weights:
                # Grid-invariant operand: DMA'd once, keep a single VMEM buffer.
                return pl.BlockSpec(shape, idx, pipeline_mode=pl.Buffered(1))
            return pl.BlockSpec(shape, idx)

        in_specs = [
            pl.BlockSpec((TB, S, D), lambda b: (b, 0, 0)),   # src tile
            const_spec((D, D)), const_spec((1, D)),          # wq, bq
            const_spec((D, D)), const_spec((1, D)),          # wk, bk
            const_spec((D, D)), const_spec((1, D)),          # wv, bv
            const_spec((1, D)), const_spec((1, D)),          # gamma1, beta1
            const_spec((D, F)), const_spec((1, F)),          # w1, b1
            const_spec((F, D)), const_spec((1, D)),          # w2, b2
            const_spec((1, D)), const_spec((1, D)),          # gamma2, beta2
        ]
        return pl.pallas_call(
            kernel,
            out_shape=jax.ShapeDtypeStruct((B, S, D), out_dtype),
            grid_spec=pltpu.PrefetchScalarGridSpec(
                num_scalar_prefetch=0,
                grid=(B // TB,),
                in_specs=in_specs,
                out_specs=pl.BlockSpec((TB, S, D), lambda b: (b, 0, 0)),
            ),
            compiler_params=pltpu.CompilerParams(
                dimension_semantics=("parallel",),
                vmem_limit_bytes=vmem_limit),
        )(*args)

    try:
        return _call(single_buffer_weights=True)
    except Exception:
        # Fallback for Pallas versions without BlockSpec(pipeline_mode=...): default
        # double-buffering for the grid-invariant operands (correctness unchanged).
        return _call(single_buffer_weights=False)


def _reference(src, p):
    """Pure-JAX reference mirroring the PyTorch forward (high-precision matmuls)."""
    hi = jax.lax.Precision.HIGHEST

    def ln(z, gamma, beta, eps=1e-5):
        mu = jnp.mean(z, axis=-1, keepdims=True)
        d = z - mu
        var = jnp.mean(d * d, axis=-1, keepdims=True)
        return d * jax.lax.rsqrt(var + eps) * gamma + beta

    q = jnp.dot(src, p["wq"], precision=hi) + p["bq"]
    k = jnp.dot(src, p["wk"], precision=hi) + p["bk"]
    v = jnp.dot(src, p["wv"], precision=hi) + p["bv"]
    scores = jnp.maximum(jnp.einsum("bsd,btd->bst", q, k, precision=hi), 0.0)
    attn = jnp.einsum("bst,btd->bsd", scores, v, precision=hi)
    h = ln(src + attn, p["gamma1"], p["beta1"])
    f = jnp.maximum(jnp.einsum("bsd,df->bsf", h, p["w1"], precision=hi) + p["b1"], 0.0)
    f = jnp.einsum("bsf,fd->bsd", f, p["w2"], precision=hi) + p["b2"]
    return ln(h + f, p["gamma2"], p["beta2"])


if __name__ == "__main__":
    B, S, D, F = 2, 8, 32, 64  # batch, seq_len, d_model, dim_feedforward

    key = jax.random.PRNGKey(0)
    keys = jax.random.split(key, 8)
    scale = 0.05

    params = {
        # Linear weights stored pre-transposed: (in_features, out_features)
        "wq": scale * jax.random.normal(keys[0], (D, D), jnp.float32),
        "bq": scale * jax.random.normal(keys[1], (1, D), jnp.float32),
        "wk": scale * jax.random.normal(keys[2], (D, D), jnp.float32),
        "bk": jnp.zeros((1, D), jnp.float32),
        "wv": scale * jax.random.normal(keys[3], (D, D), jnp.float32),
        "bv": jnp.zeros((1, D), jnp.float32),
        "gamma1": jnp.ones((1, D), jnp.float32),
        "beta1": jnp.zeros((1, D), jnp.float32),
        "w1": scale * jax.random.normal(keys[4], (D, F), jnp.float32),
        "b1": scale * jax.random.normal(keys[5], (1, F), jnp.float32),
        "w2": scale * jax.random.normal(keys[6], (F, D), jnp.float32),
        "b2": jnp.zeros((1, D), jnp.float32),
        "gamma2": jnp.ones((1, D), jnp.float32),
        "beta2": jnp.zeros((1, D), jnp.float32),
    }

    src = jax.random.normal(keys[7], (B, S, D), jnp.float32)
    ref = _reference(src, params)

    # f32 MXU operands (tighter check of the kernel's semantics).
    out_f32 = jax.block_until_ready(
        custom_encoder_layer(src, params, mxu_dtype=jnp.float32))
    assert out_f32.shape == (B, S, D)
    assert jnp.allclose(out_f32, ref, atol=2e-2, rtol=2e-2), "f32 mismatch vs reference"

    # bf16 MXU operands with f32 accumulation (default fast path): loose tolerance.
    out_bf16 = jax.block_until_ready(custom_encoder_layer(src, params))
    assert out_bf16.shape == (B, S, D)
    assert jnp.allclose(out_bf16, ref, atol=5e-2, rtol=5e-2), "bf16 mismatch vs reference"

    print("KERNEL_OK")
</pallas_src>

<mosaic_0001>
module attributes {stable_mosaic.version = 11 : i64} {
  func.func @kernel(%arg0: i32, %arg1: memref<1x8x32xf32, #tpu.memory_space<vmem>>, %arg2: memref<32x32xf32, #tpu.memory_space<vmem>>, %arg3: memref<1x32xf32, #tpu.memory_space<vmem>>, %arg4: memref<32x32xf32, #tpu.memory_space<vmem>>, %arg5: memref<1x32xf32, #tpu.memory_space<vmem>>, %arg6: memref<32x32xf32, #tpu.memory_space<vmem>>, %arg7: memref<1x32xf32, #tpu.memory_space<vmem>>, %arg8: memref<1x32xf32, #tpu.memory_space<vmem>>, %arg9: memref<1x32xf32, #tpu.memory_space<vmem>>, %arg10: memref<32x64xf32, #tpu.memory_space<vmem>>, %arg11: memref<1x64xf32, #tpu.memory_space<vmem>>, %arg12: memref<64x32xf32, #tpu.memory_space<vmem>>, %arg13: memref<1x32xf32, #tpu.memory_space<vmem>>, %arg14: memref<1x32xf32, #tpu.memory_space<vmem>>, %arg15: memref<1x32xf32, #tpu.memory_space<vmem>>, %arg16: memref<1x8x32xf32, #tpu.memory_space<vmem>>) attributes {dimension_semantics = [#tpu.dimension_semantics<parallel>], iteration_bounds = array<i64: 2>, scalar_prefetch = 0 : i64, scratch_operands = 0 : i64, tpu.core_type = #tpu.core_type<tc>, window_params = [{transform_indices = @transform_0, window_bounds = array<i64: 1, 8, 32>}, {pipeline_mode = #tpu.pipeline_mode<synchronous>, transform_indices = @transform_1, window_bounds = array<i64: 32, 32>}, {pipeline_mode = #tpu.pipeline_mode<synchronous>, transform_indices = @transform_2, window_bounds = array<i64: 1, 32>}, {pipeline_mode = #tpu.pipeline_mode<synchronous>, transform_indices = @transform_3, window_bounds = array<i64: 32, 32>}, {pipeline_mode = #tpu.pipeline_mode<synchronous>, transform_indices = @transform_4, window_bounds = array<i64: 1, 32>}, {pipeline_mode = #tpu.pipeline_mode<synchronous>, transform_indices = @transform_5, window_bounds = array<i64: 32, 32>}, {pipeline_mode = #tpu.pipeline_mode<synchronous>, transform_indices = @transform_6, window_bounds = array<i64: 1, 32>}, {pipeline_mode = #tpu.pipeline_mode<synchronous>, transform_indices = @transform_7, window_bounds = array<i64: 1, 32>}, {pipeline_mode = #tpu.pipeline_mode<synchronous>, transform_indices = @transform_8, window_bounds = array<i64: 1, 32>}, {pipeline_mode = #tpu.pipeline_mode<synchronous>, transform_indices = @transform_9, window_bounds = array<i64: 32, 64>}, {pipeline_mode = #tpu.pipeline_mode<synchronous>, transform_indices = @transform_10, window_bounds = array<i64: 1, 64>}, {pipeline_mode = #tpu.pipeline_mode<synchronous>, transform_indices = @transform_11, window_bounds = array<i64: 64, 32>}, {pipeline_mode = #tpu.pipeline_mode<synchronous>, transform_indices = @transform_12, window_bounds = array<i64: 1, 32>}, {pipeline_mode = #tpu.pipeline_mode<synchronous>, transform_indices = @transform_13, window_bounds = array<i64: 1, 32>}, {pipeline_mode = #tpu.pipeline_mode<synchronous>, transform_indices = @transform_14, window_bounds = array<i64: 1, 32>}, {transform_indices = @transform_15, window_bounds = array<i64: 1, 8, 32>}]} {
    %c0 = arith.constant 0 : index
    %c0_0 = arith.constant 0 : index
    %c0_1 = arith.constant 0 : index
    %0 = vector.load %arg1[%c0, %c0_0, %c0_1] : memref<1x8x32xf32, #tpu.memory_space<vmem>>, vector<1x8x32xf32>
    %1 = vector.shape_cast %0 : vector<1x8x32xf32> to vector<8x32xf32>
    %c0_2 = arith.constant 0 : index
    %c0_3 = arith.constant 0 : index
    %2 = vector.load %arg2[%c0_2, %c0_3] : memref<32x32xf32, #tpu.memory_space<vmem>>, vector<32x32xf32>
    %cst = arith.constant dense<0.000000e+00> : vector<8x32xf32>
    %3 = tpu.matmul %1, %2, %cst {dimension_numbers = #tpu.dot_dimension_numbers<[1], [0], [0], [1], [0, 0, 1, 1], [], []>} : vector<8x32xf32>, vector<32x32xf32>, vector<8x32xf32> -> vector<8x32xf32>
    %c0_4 = arith.constant 0 : index
    %c0_5 = arith.constant 0 : index
    %4 = vector.load %arg3[%c0_4, %c0_5] : memref<1x32xf32, #tpu.memory_space<vmem>>, vector<1x32xf32>
    %5 = vector.broadcast %4 : vector<1x32xf32> to vector<8x32xf32>
    %6 = arith.addf %3, %5 : vector<8x32xf32>
    %c0_6 = arith.constant 0 : index
    %c0_7 = arith.constant 0 : index
    %7 = vector.load %arg4[%c0_6, %c0_7] : memref<32x32xf32, #tpu.memory_space<vmem>>, vector<32x32xf32>
    %cst_8 = arith.constant dense<0.000000e+00> : vector<8x32xf32>
    %8 = tpu.matmul %1, %7, %cst_8 {dimension_numbers = #tpu.dot_dimension_numbers<[1], [0], [0], [1], [0, 0, 1, 1], [], []>} : vector<8x32xf32>, vector<32x32xf32>, vector<8x32xf32> -> vector<8x32xf32>
    %c0_9 = arith.constant 0 : index
    %c0_10 = arith.constant 0 : index
    %9 = vector.load %arg5[%c0_9, %c0_10] : memref<1x32xf32, #tpu.memory_space<vmem>>, vector<1x32xf32>
    %10 = vector.broadcast %9 : vector<1x32xf32> to vector<8x32xf32>
    %11 = arith.addf %8, %10 : vector<8x32xf32>
    %c0_11 = arith.constant 0 : index
    %c0_12 = arith.constant 0 : index
    %12 = vector.load %arg6[%c0_11, %c0_12] : memref<32x32xf32, #tpu.memory_space<vmem>>, vector<32x32xf32>
    %cst_13 = arith.constant dense<0.000000e+00> : vector<8x32xf32>
    %13 = tpu.matmul %1, %12, %cst_13 {dimension_numbers = #tpu.dot_dimension_numbers<[1], [0], [0], [1], [0, 0, 1, 1], [], []>} : vector<8x32xf32>, vector<32x32xf32>, vector<8x32xf32> -> vector<8x32xf32>
    %c0_14 = arith.constant 0 : index
    %c0_15 = arith.constant 0 : index
    %14 = vector.load %arg7[%c0_14, %c0_15] : memref<1x32xf32, #tpu.memory_space<vmem>>, vector<1x32xf32>
    %15 = vector.broadcast %14 : vector<1x32xf32> to vector<8x32xf32>
    %16 = arith.addf %13, %15 : vector<8x32xf32>
    %17 = vector.shape_cast %6 : vector<8x32xf32> to vector<1x8x32xf32>
    %18 = vector.shape_cast %11 : vector<8x32xf32> to vector<1x8x32xf32>
    %19 = vector.shape_cast %16 : vector<8x32xf32> to vector<1x8x32xf32>
    %cst_16 = arith.constant 0.000000e+00 : f32
    %20 = vector.broadcast %cst_16 : f32 to vector<1x8x32xf32>
    "tpu.trace_start"() <{level = 10 : i32, message = "bsd,btd->bst"}> : () -> ()
    %cst_17 = arith.constant dense<0.000000e+00> : vector<1x8x8xf32>
    %21 = tpu.matmul %17, %18, %cst_17 {dimension_numbers = #tpu.dot_dimension_numbers<[2], [2], [1], [1], [0, 0, 0, 1, 1, 1], [0], [0]>} : vector<1x8x32xf32>, vector<1x8x32xf32>, vector<1x8x8xf32> -> vector<1x8x8xf32>
    "tpu.trace_stop"() : () -> ()
    %cst_18 = arith.constant 0.000000e+00 : f32
    %22 = vector.broadcast %cst_18 : f32 to vector<1x8x8xf32>
    %23 = arith.maximumf %21, %22 : vector<1x8x8xf32>
    "tpu.trace_start"() <{level = 10 : i32, message = "bst,btd->bsd"}> : () -> ()
    %cst_19 = arith.constant dense<0.000000e+00> : vector<1x8x32xf32>
    %24 = tpu.matmul %23, %19, %cst_19 {dimension_numbers = #tpu.dot_dimension_numbers<[2], [1], [1], [2], [0, 0, 0, 1, 1, 2], [0], [0]>} : vector<1x8x8xf32>, vector<1x8x32xf32>, vector<1x8x32xf32> -> vector<1x8x32xf32>
    "tpu.trace_stop"() : () -> ()
    %25 = arith.addf %20, %24 : vector<1x8x32xf32>
    %26 = vector.shape_cast %25 : vector<1x8x32xf32> to vector<8x32xf32>
    %27 = arith.addf %1, %26 : vector<8x32xf32>
    %c0_20 = arith.constant 0 : index
    %c0_21 = arith.constant 0 : index
    %28 = vector.load %arg8[%c0_20, %c0_21] : memref<1x32xf32, #tpu.memory_space<vmem>>, vector<1x32xf32>
    %c0_22 = arith.constant 0 : index
    %c0_23 = arith.constant 0 : index
    %29 = vector.load %arg9[%c0_22, %c0_23] : memref<1x32xf32, #tpu.memory_space<vmem>>, vector<1x32xf32>
    %cst_24 = arith.constant dense<0.000000e+00> : vector<8xf32>
    %30 = vector.multi_reduction <add>, %27, %cst_24 [1] : vector<8x32xf32> to vector<8xf32>
    %31 = vector.shape_cast %30 : vector<8xf32> to vector<8x1xf32>
    %cst_25 = arith.constant 3.200000e+01 : f32
    %32 = vector.broadcast %cst_25 : f32 to vector<8x1xf32>
    %33 = arith.divf %31, %32 : vector<8x1xf32>
    %34 = vector.broadcast %33 : vector<8x1xf32> to vector<8x32xf32>
    %35 = arith.subf %27, %34 : vector<8x32xf32>
    %36 = arith.mulf %35, %35 : vector<8x32xf32>
    %cst_26 = arith.constant dense<0.000000e+00> : vector<8xf32>
    %37 = vector.multi_reduction <add>, %36, %cst_26 [1] : vector<8x32xf32> to vector<8xf32>
    %38 = vector.shape_cast %37 : vector<8xf32> to vector<8x1xf32>
    %cst_27 = arith.constant 3.200000e+01 : f32
    %39 = vector.broadcast %cst_27 : f32 to vector<8x1xf32>
    %40 = arith.divf %38, %39 : vector<8x1xf32>
    %cst_28 = arith.constant 9.99999974E-6 : f32
    %41 = vector.broadcast %cst_28 : f32 to vector<8x1xf32>
    %42 = arith.addf %40, %41 : vector<8x1xf32>
    %43 = math.rsqrt %42 : vector<8x1xf32>
    %44 = vector.broadcast %43 : vector<8x1xf32> to vector<8x32xf32>
    %45 = arith.mulf %35, %44 : vector<8x32xf32>
    %46 = vector.broadcast %28 : vector<1x32xf32> to vector<8x32xf32>
    %47 = arith.mulf %45, %46 : vector<8x32xf32>
    %48 = vector.broadcast %29 : vector<1x32xf32> to vector<8x32xf32>
    %49 = arith.addf %47, %48 : vector<8x32xf32>
    %c0_29 = arith.constant 0 : index
    %c0_30 = arith.constant 0 : index
    %50 = vector.load %arg10[%c0_29, %c0_30] : memref<32x64xf32, #tpu.memory_space<vmem>>, vector<32x64xf32>
    %cst_31 = arith.constant dense<0.000000e+00> : vector<8x64xf32>
    %51 = tpu.matmul %49, %50, %cst_31 {dimension_numbers = #tpu.dot_dimension_numbers<[1], [0], [0], [1], [0, 0, 1, 1], [], []>} : vector<8x32xf32>, vector<32x64xf32>, vector<8x64xf32> -> vector<8x64xf32>
    %c0_32 = arith.constant 0 : index
    %c0_33 = arith.constant 0 : index
    %52 = vector.load %arg11[%c0_32, %c0_33] : memref<1x64xf32, #tpu.memory_space<vmem>>, vector<1x64xf32>
    %53 = vector.broadcast %52 : vector<1x64xf32> to vector<8x64xf32>
    %54 = arith.addf %51, %53 : vector<8x64xf32>
    %cst_34 = arith.constant 0.000000e+00 : f32
    %55 = vector.broadcast %cst_34 : f32 to vector<8x64xf32>
    %56 = arith.maximumf %54, %55 : vector<8x64xf32>
    %c0_35 = arith.constant 0 : index
    %c0_36 = arith.constant 0 : index
    %57 = vector.load %arg12[%c0_35, %c0_36] : memref<64x32xf32, #tpu.memory_space<vmem>>, vector<64x32xf32>
    %cst_37 = arith.constant dense<0.000000e+00> : vector<8x32xf32>
    %58 = tpu.matmul %56, %57, %cst_37 {dimension_numbers = #tpu.dot_dimension_numbers<[1], [0], [0], [1], [0, 0, 1, 1], [], []>} : vector<8x64xf32>, vector<64x32xf32>, vector<8x32xf32> -> vector<8x32xf32>
    %c0_38 = arith.constant 0 : index
    %c0_39 = arith.constant 0 : index
    %59 = vector.load %arg13[%c0_38, %c0_39] : memref<1x32xf32, #tpu.memory_space<vmem>>, vector<1x32xf32>
    %60 = vector.broadcast %59 : vector<1x32xf32> to vector<8x32xf32>
    %61 = arith.addf %58, %60 : vector<8x32xf32>
    %62 = arith.addf %49, %61 : vector<8x32xf32>
    %c0_40 = arith.constant 0 : index
    %c0_41 = arith.constant 0 : index
    %63 = vector.load %arg14[%c0_40, %c0_41] : memref<1x32xf32, #tpu.memory_space<vmem>>, vector<1x32xf32>
    %c0_42 = arith.constant 0 : index
    %c0_43 = arith.constant 0 : index
    %64 = vector.load %arg15[%c0_42, %c0_43] : memref<1x32xf32, #tpu.memory_space<vmem>>, vector<1x32xf32>
    %cst_44 = arith.constant dense<0.000000e+00> : vector<8xf32>
    %65 = vector.multi_reduction <add>, %62, %cst_44 [1] : vector<8x32xf32> to vector<8xf32>
    %66 = vector.shape_cast %65 : vector<8xf32> to vector<8x1xf32>
    %cst_45 = arith.constant 3.200000e+01 : f32
    %67 = vector.broadcast %cst_45 : f32 to vector<8x1xf32>
    %68 = arith.divf %66, %67 : vector<8x1xf32>
    %69 = vector.broadcast %68 : vector<8x1xf32> to vector<8x32xf32>
    %70 = arith.subf %62, %69 : vector<8x32xf32>
    %71 = arith.mulf %70, %70 : vector<8x32xf32>
    %cst_46 = arith.constant dense<0.000000e+00> : vector<8xf32>
    %72 = vector.multi_reduction <add>, %71, %cst_46 [1] : vector<8x32xf32> to vector<8xf32>
    %73 = vector.shape_cast %72 : vector<8xf32> to vector<8x1xf32>
    %cst_47 = arith.constant 3.200000e+01 : f32
    %74 = vector.broadcast %cst_47 : f32 to vector<8x1xf32>
    %75 = arith.divf %73, %74 : vector<8x1xf32>
    %cst_48 = arith.constant 9.99999974E-6 : f32
    %76 = vector.broadcast %cst_48 : f32 to vector<8x1xf32>
    %77 = arith.addf %75, %76 : vector<8x1xf32>
    %78 = math.rsqrt %77 : vector<8x1xf32>
    %79 = vector.broadcast %78 : vector<8x1xf32> to vector<8x32xf32>
    %80 = arith.mulf %70, %79 : vector<8x32xf32>
    %81 = vector.broadcast %63 : vector<1x32xf32> to vector<8x32xf32>
    %82 = arith.mulf %80, %81 : vector<8x32xf32>
    %83 = vector.broadcast %64 : vector<1x32xf32> to vector<8x32xf32>
    %84 = arith.addf %82, %83 : vector<8x32xf32>
    %85 = vector.shape_cast %84 : vector<8x32xf32> to vector<1x8x32xf32>
    %c0_49 = arith.constant 0 : index
    %c0_50 = arith.constant 0 : index
    %c0_51 = arith.constant 0 : index
    %86 = vector.load %arg16[%c0_49, %c0_50, %c0_51] : memref<1x8x32xf32, #tpu.memory_space<vmem>>, vector<1x8x32xf32>
    tpu.vector_store %arg16[%c0_49, %c0_50, %c0_51], %85 {strides = array<i32>} : memref<1x8x32xf32, #tpu.memory_space<vmem>>, vector<1x8x32xf32>,
    return
  }
  func.func @transform_0(%arg0: i32) -> (i32, i32, i32) {
    %c0_i32 = arith.constant 0 : i32
    %c0_i32_0 = arith.constant 0 : i32
    %c0_i32_1 = arith.constant 0 : i32
    return %arg0, %c0_i32, %c0_i32_0 : i32, i32, i32
  }
  func.func @transform_1(%arg0: i32) -> (i32, i32) {
    %c0_i32 = arith.constant 0 : i32
    %c0_i32_0 = arith.constant 0 : i32
    %c0_i32_1 = arith.constant 0 : i32
    return %c0_i32, %c0_i32_0 : i32, i32
  }
  func.func @transform_2(%arg0: i32) -> (i32, i32) {
    %c0_i32 = arith.constant 0 : i32
    %c0_i32_0 = arith.constant 0 : i32
    %c0_i32_1 = arith.constant 0 : i32
    return %c0_i32, %c0_i32_0 : i32, i32
  }
  func.func @transform_3(%arg0: i32) -> (i32, i32) {
    %c0_i32 = arith.constant 0 : i32
    %c0_i32_0 = arith.constant 0 : i32
    %c0_i32_1 = arith.constant 0 : i32
    return %c0_i32, %c0_i32_0 : i32, i32
  }
  func.func @transform_4(%arg0: i32) -> (i32, i32) {
    %c0_i32 = arith.constant 0 : i32
    %c0_i32_0 = arith.constant 0 : i32
    %c0_i32_1 = arith.constant 0 : i32
    return %c0_i32, %c0_i32_0 : i32, i32
  }
  func.func @transform_5(%arg0: i32) -> (i32, i32) {
    %c0_i32 = arith.constant 0 : i32
    %c0_i32_0 = arith.constant 0 : i32
    %c0_i32_1 = arith.constant 0 : i32
    return %c0_i32, %c0_i32_0 : i32, i32
  }
  func.func @transform_6(%arg0: i32) -> (i32, i32) {
    %c0_i32 = arith.constant 0 : i32
    %c0_i32_0 = arith.constant 0 : i32
    %c0_i32_1 = arith.constant 0 : i32
    return %c0_i32, %c0_i32_0 : i32, i32
  }
  func.func @transform_7(%arg0: i32) -> (i32, i32) {
    %c0_i32 = arith.constant 0 : i32
    %c0_i32_0 = arith.constant 0 : i32
    %c0_i32_1 = arith.constant 0 : i32
    return %c0_i32, %c0_i32_0 : i32, i32
  }
  func.func @transform_8(%arg0: i32) -> (i32, i32) {
    %c0_i32 = arith.constant 0 : i32
    %c0_i32_0 = arith.constant 0 : i32
    %c0_i32_1 = arith.constant 0 : i32
    return %c0_i32, %c0_i32_0 : i32, i32
  }
  func.func @transform_9(%arg0: i32) -> (i32, i32) {
    %c0_i32 = arith.constant 0 : i32
    %c0_i32_0 = arith.constant 0 : i32
    %c0_i32_1 = arith.constant 0 : i32
    return %c0_i32, %c0_i32_0 : i32, i32
  }
  func.func @transform_10(%arg0: i32) -> (i32, i32) {
    %c0_i32 = arith.constant 0 : i32
    %c0_i32_0 = arith.constant 0 : i32
    %c0_i32_1 = arith.constant 0 : i32
    return %c0_i32, %c0_i32_0 : i32, i32
  }
  func.func @transform_11(%arg0: i32) -> (i32, i32) {
    %c0_i32 = arith.constant 0 : i32
    %c0_i32_0 = arith.constant 0 : i32
    %c0_i32_1 = arith.constant 0 : i32
    return %c0_i32, %c0_i32_0 : i32, i32
  }
  func.func @transform_12(%arg0: i32) -> (i32, i32) {
    %c0_i32 = arith.constant 0 : i32
    %c0_i32_0 = arith.constant 0 : i32
    %c0_i32_1 = arith.constant 0 : i32
    return %c0_i32, %c0_i32_0 : i32, i32
  }
  func.func @transform_13(%arg0: i32) -> (i32, i32) {
    %c0_i32 = arith.constant 0 : i32
    %c0_i32_0 = arith.constant 0 : i32
    %c0_i32_1 = arith.constant 0 : i32
    return %c0_i32, %c0_i32_0 : i32, i32
  }
  func.func @transform_14(%arg0: i32) -> (i32, i32) {
    %c0_i32 = arith.constant 0 : i32
    %c0_i32_0 = arith.constant 0 : i32
    %c0_i32_1 = arith.constant 0 : i32
    return %c0_i32, %c0_i32_0 : i32, i32
  }
  func.func @transform_15(%arg0: i32) -> (i32, i32, i32) {
    %c0_i32 = arith.constant 0 : i32
    %c0_i32_0 = arith.constant 0 : i32
    %c0_i32_1 = arith.constant 0 : i32
    return %arg0, %c0_i32, %c0_i32_0 : i32, i32, i32
  }
}

module attributes {stable_mosaic.version = 11 : i64} {
  func.func @kernel(%arg0: i32, %arg1: memref<1x8x32xf32, #tpu.memory_space<vmem>>, %arg2: memref<32x32xf32, #tpu.memory_space<vmem>>, %arg3: memref<1x32xf32, #tpu.memory_space<vmem>>, %arg4: memref<32x32xf32, #tpu.memory_space<vmem>>, %arg5: memref<1x32xf32, #tpu.memory_space<vmem>>, %arg6: memref<32x32xf32, #tpu.memory_space<vmem>>, %arg7: memref<1x32xf32, #tpu.memory_space<vmem>>, %arg8: memref<1x32xf32, #tpu.memory_space<vmem>>, %arg9: memref<1x32xf32, #tpu.memory_space<vmem>>, %arg10: memref<32x64xf32, #tpu.memory_space<vmem>>, %arg11: memref<1x64xf32, #tpu.memory_space<vmem>>, %arg12: memref<64x32xf32, #tpu.memory_space<vmem>>, %arg13: memref<1x32xf32, #tpu.memory_space<vmem>>, %arg14: memref<1x32xf32, #tpu.memory_space<vmem>>, %arg15: memref<1x32xf32, #tpu.memory_space<vmem>>, %arg16: memref<1x8x32xf32, #tpu.memory_space<vmem>>) attributes {dimension_semantics = [#tpu.dimension_semantics<parallel>], iteration_bounds = array<i64: 2>, scalar_prefetch = 0 : i64, scratch_operands = 0 : i64, tpu.core_type = #tpu.core_type<tc>, window_params = [{transform_indices = @transform_0, window_bounds = array<i64: 1, 8, 32>}, {pipeline_mode = #tpu.pipeline_mode<synchronous>, transform_indices = @transform_1, window_bounds = array<i64: 32, 32>}, {pipeline_mode = #tpu.pipeline_mode<synchronous>, transform_indices = @transform_2, window_bounds = array<i64: 1, 32>}, {pipeline_mode = #tpu.pipeline_mode<synchronous>, transform_indices = @transform_3, window_bounds = array<i64: 32, 32>}, {pipeline_mode = #tpu.pipeline_mode<synchronous>, transform_indices = @transform_4, window_bounds = array<i64: 1, 32>}, {pipeline_mode = #tpu.pipeline_mode<synchronous>, transform_indices = @transform_5, window_bounds = array<i64: 32, 32>}, {pipeline_mode = #tpu.pipeline_mode<synchronous>, transform_indices = @transform_6, window_bounds = array<i64: 1, 32>}, {pipeline_mode = #tpu.pipeline_mode<synchronous>, transform_indices = @transform_7, window_bounds = array<i64: 1, 32>}, {pipeline_mode = #tpu.pipeline_mode<synchronous>, transform_indices = @transform_8, window_bounds = array<i64: 1, 32>}, {pipeline_mode = #tpu.pipeline_mode<synchronous>, transform_indices = @transform_9, window_bounds = array<i64: 32, 64>}, {pipeline_mode = #tpu.pipeline_mode<synchronous>, transform_indices = @transform_10, window_bounds = array<i64: 1, 64>}, {pipeline_mode = #tpu.pipeline_mode<synchronous>, transform_indices = @transform_11, window_bounds = array<i64: 64, 32>}, {pipeline_mode = #tpu.pipeline_mode<synchronous>, transform_indices = @transform_12, window_bounds = array<i64: 1, 32>}, {pipeline_mode = #tpu.pipeline_mode<synchronous>, transform_indices = @transform_13, window_bounds = array<i64: 1, 32>}, {pipeline_mode = #tpu.pipeline_mode<synchronous>, transform_indices = @transform_14, window_bounds = array<i64: 1, 32>}, {transform_indices = @transform_15, window_bounds = array<i64: 1, 8, 32>}]} {
    %c0 = arith.constant 0 : index
    %c0_0 = arith.constant 0 : index
    %c0_1 = arith.constant 0 : index
    %0 = vector.load %arg1[%c0, %c0_0, %c0_1] : memref<1x8x32xf32, #tpu.memory_space<vmem>>, vector<1x8x32xf32>
    %1 = vector.shape_cast %0 : vector<1x8x32xf32> to vector<8x32xf32>
    %c0_2 = arith.constant 0 : index
    %c0_3 = arith.constant 0 : index
    %2 = vector.load %arg2[%c0_2, %c0_3] : memref<32x32xf32, #tpu.memory_space<vmem>>, vector<32x32xf32>
    %cst = arith.constant dense<0.000000e+00> : vector<8x32xf32>
    %3 = tpu.matmul %1, %2, %cst {dimension_numbers = #tpu.dot_dimension_numbers<[1], [0], [0], [1], [0, 0, 1, 1], [], []>} : vector<8x32xf32>, vector<32x32xf32>, vector<8x32xf32> -> vector<8x32xf32>
    %c0_4 = arith.constant 0 : index
    %c0_5 = arith.constant 0 : index
    %4 = vector.load %arg3[%c0_4, %c0_5] : memref<1x32xf32, #tpu.memory_space<vmem>>, vector<1x32xf32>
    %5 = vector.broadcast %4 : vector<1x32xf32> to vector<8x32xf32>
    %6 = arith.addf %3, %5 : vector<8x32xf32>
    %c0_6 = arith.constant 0 : index
    %c0_7 = arith.constant 0 : index
    %7 = vector.load %arg4[%c0_6, %c0_7] : memref<32x32xf32, #tpu.memory_space<vmem>>, vector<32x32xf32>
    %cst_8 = arith.constant dense<0.000000e+00> : vector<8x32xf32>
    %8 = tpu.matmul %1, %7, %cst_8 {dimension_numbers = #tpu.dot_dimension_numbers<[1], [0], [0], [1], [0, 0, 1, 1], [], []>} : vector<8x32xf32>, vector<32x32xf32>, vector<8x32xf32> -> vector<8x32xf32>
    %c0_9 = arith.constant 0 : index
    %c0_10 = arith.constant 0 : index
    %9 = vector.load %arg5[%c0_9, %c0_10] : memref<1x32xf32, #tpu.memory_space<vmem>>, vector<1x32xf32>
    %10 = vector.broadcast %9 : vector<1x32xf32> to vector<8x32xf32>
    %11 = arith.addf %8, %10 : vector<8x32xf32>
    %c0_11 = arith.constant 0 : index
    %c0_12 = arith.constant 0 : index
    %12 = vector.load %arg6[%c0_11, %c0_12] : memref<32x32xf32, #tpu.memory_space<vmem>>, vector<32x32xf32>
    %cst_13 = arith.constant dense<0.000000e+00> : vector<8x32xf32>
    %13 = tpu.matmul %1, %12, %cst_13 {dimension_numbers = #tpu.dot_dimension_numbers<[1], [0], [0], [1], [0, 0, 1, 1], [], []>} : vector<8x32xf32>, vector<32x32xf32>, vector<8x32xf32> -> vector<8x32xf32>
    %c0_14 = arith.constant 0 : index
    %c0_15 = arith.constant 0 : index
    %14 = vector.load %arg7[%c0_14, %c0_15] : memref<1x32xf32, #tpu.memory_space<vmem>>, vector<1x32xf32>
    %15 = vector.broadcast %14 : vector<1x32xf32> to vector<8x32xf32>
    %16 = arith.addf %13, %15 : vector<8x32xf32>
    %17 = vector.shape_cast %6 : vector<8x32xf32> to vector<1x8x32xf32>
    %18 = vector.shape_cast %11 : vector<8x32xf32> to vector<1x8x32xf32>
    %19 = vector.shape_cast %16 : vector<8x32xf32> to vector<1x8x32xf32>
    %cst_16 = arith.constant 0.000000e+00 : f32
    %20 = vector.broadcast %cst_16 : f32 to vector<1x8x32xf32>
    "tpu.trace_start"() <{level = 10 : i32, message = "bsd,btd->bst"}> : () -> ()
    %cst_17 = arith.constant dense<0.000000e+00> : vector<1x8x8xf32>
    %21 = tpu.matmul %17, %18, %cst_17 {dimension_numbers = #tpu.dot_dimension_numbers<[2], [2], [1], [1], [0, 0, 0, 1, 1, 1], [0], [0]>} : vector<1x8x32xf32>, vector<1x8x32xf32>, vector<1x8x8xf32> -> vector<1x8x8xf32>
    "tpu.trace_stop"() : () -> ()
    %cst_18 = arith.constant 0.000000e+00 : f32
    %22 = vector.broadcast %cst_18 : f32 to vector<1x8x8xf32>
    %23 = arith.maximumf %21, %22 : vector<1x8x8xf32>
    "tpu.trace_start"() <{level = 10 : i32, message = "bst,btd->bsd"}> : () -> ()
    %cst_19 = arith.constant dense<0.000000e+00> : vector<1x8x32xf32>
    %24 = tpu.matmul %23, %19, %cst_19 {dimension_numbers = #tpu.dot_dimension_numbers<[2], [1], [1], [2], [0, 0, 0, 1, 1, 2], [0], [0]>} : vector<1x8x8xf32>, vector<1x8x32xf32>, vector<1x8x32xf32> -> vector<1x8x32xf32>
    "tpu.trace_stop"() : () -> ()
    %25 = arith.addf %20, %24 : vector<1x8x32xf32>
    %26 = vector.shape_cast %25 : vector<1x8x32xf32> to vector<8x32xf32>
    %27 = arith.addf %1, %26 : vector<8x32xf32>
    %c0_20 = arith.constant 0 : index
    %c0_21 = arith.constant 0 : index
    %28 = vector.load %arg8[%c0_20, %c0_21] : memref<1x32xf32, #tpu.memory_space<vmem>>, vector<1x32xf32>
    %c0_22 = arith.constant 0 : index
    %c0_23 = arith.constant 0 : index
    %29 = vector.load %arg9[%c0_22, %c0_23] : memref<1x32xf32, #tpu.memory_space<vmem>>, vector<1x32xf32>
    %cst_24 = arith.constant dense<0.000000e+00> : vector<8xf32>
    %30 = vector.multi_reduction <add>, %27, %cst_24 [1] : vector<8x32xf32> to vector<8xf32>
    %31 = vector.shape_cast %30 : vector<8xf32> to vector<8x1xf32>
    %cst_25 = arith.constant 3.200000e+01 : f32
    %32 = vector.broadcast %cst_25 : f32 to vector<8x1xf32>
    %33 = arith.divf %31, %32 : vector<8x1xf32>
    %34 = vector.broadcast %33 : vector<8x1xf32> to vector<8x32xf32>
    %35 = arith.subf %27, %34 : vector<8x32xf32>
    %36 = arith.mulf %35, %35 : vector<8x32xf32>
    %cst_26 = arith.constant dense<0.000000e+00> : vector<8xf32>
    %37 = vector.multi_reduction <add>, %36, %cst_26 [1] : vector<8x32xf32> to vector<8xf32>
    %38 = vector.shape_cast %37 : vector<8xf32> to vector<8x1xf32>
    %cst_27 = arith.constant 3.200000e+01 : f32
    %39 = vector.broadcast %cst_27 : f32 to vector<8x1xf32>
    %40 = arith.divf %38, %39 : vector<8x1xf32>
    %cst_28 = arith.constant 9.99999974E-6 : f32
    %41 = vector.broadcast %cst_28 : f32 to vector<8x1xf32>
    %42 = arith.addf %40, %41 : vector<8x1xf32>
    %43 = math.rsqrt %42 : vector<8x1xf32>
    %44 = vector.broadcast %43 : vector<8x1xf32> to vector<8x32xf32>
    %45 = arith.mulf %35, %44 : vector<8x32xf32>
    %46 = vector.broadcast %28 : vector<1x32xf32> to vector<8x32xf32>
    %47 = arith.mulf %45, %46 : vector<8x32xf32>
    %48 = vector.broadcast %29 : vector<1x32xf32> to vector<8x32xf32>
    %49 = arith.addf %47, %48 : vector<8x32xf32>
    %c0_29 = arith.constant 0 : index
    %c0_30 = arith.constant 0 : index
    %50 = vector.load %arg10[%c0_29, %c0_30] : memref<32x64xf32, #tpu.memory_space<vmem>>, vector<32x64xf32>
    %cst_31 = arith.constant dense<0.000000e+00> : vector<8x64xf32>
    %51 = tpu.matmul %49, %50, %cst_31 {dimension_numbers = #tpu.dot_dimension_numbers<[1], [0], [0], [1], [0, 0, 1, 1], [], []>} : vector<8x32xf32>, vector<32x64xf32>, vector<8x64xf32> -> vector<8x64xf32>
    %c0_32 = arith.constant 0 : index
    %c0_33 = arith.constant 0 : index
    %52 = vector.load %arg11[%c0_32, %c0_33] : memref<1x64xf32, #tpu.memory_space<vmem>>, vector<1x64xf32>
    %53 = vector.broadcast %52 : vector<1x64xf32> to vector<8x64xf32>
    %54 = arith.addf %51, %53 : vector<8x64xf32>
    %cst_34 = arith.constant 0.000000e+00 : f32
    %55 = vector.broadcast %cst_34 : f32 to vector<8x64xf32>
    %56 = arith.maximumf %54, %55 : vector<8x64xf32>
    %c0_35 = arith.constant 0 : index
    %c0_36 = arith.constant 0 : index
    %57 = vector.load %arg12[%c0_35, %c0_36] : memref<64x32xf32, #tpu.memory_space<vmem>>, vector<64x32xf32>
    %cst_37 = arith.constant dense<0.000000e+00> : vector<8x32xf32>
    %58 = tpu.matmul %56, %57, %cst_37 {dimension_numbers = #tpu.dot_dimension_numbers<[1], [0], [0], [1], [0, 0, 1, 1], [], []>} : vector<8x64xf32>, vector<64x32xf32>, vector<8x32xf32> -> vector<8x32xf32>
    %c0_38 = arith.constant 0 : index
    %c0_39 = arith.constant 0 : index
    %59 = vector.load %arg13[%c0_38, %c0_39] : memref<1x32xf32, #tpu.memory_space<vmem>>, vector<1x32xf32>
    %60 = vector.broadcast %59 : vector<1x32xf32> to vector<8x32xf32>
    %61 = arith.addf %58, %60 : vector<8x32xf32>
    %62 = arith.addf %49, %61 : vector<8x32xf32>
    %c0_40 = arith.constant 0 : index
    %c0_41 = arith.constant 0 : index
    %63 = vector.load %arg14[%c0_40, %c0_41] : memref<1x32xf32, #tpu.memory_space<vmem>>, vector<1x32xf32>
    %c0_42 = arith.constant 0 : index
    %c0_43 = arith.constant 0 : index
    %64 = vector.load %arg15[%c0_42, %c0_43] : memref<1x32xf32, #tpu.memory_space<vmem>>, vector<1x32xf32>
    %cst_44 = arith.constant dense<0.000000e+00> : vector<8xf32>
    %65 = vector.multi_reduction <add>, %62, %cst_44 [1] : vector<8x32xf32> to vector<8xf32>
    %66 = vector.shape_cast %65 : vector<8xf32> to vector<8x1xf32>
    %cst_45 = arith.constant 3.200000e+01 : f32
    %67 = vector.broadcast %cst_45 : f32 to vector<8x1xf32>
    %68 = arith.divf %66, %67 : vector<8x1xf32>
    %69 = vector.broadcast %68 : vector<8x1xf32> to vector<8x32xf32>
    %70 = arith.subf %62, %69 : vector<8x32xf32>
    %71 = arith.mulf %70, %70 : vector<8x32xf32>
    %cst_46 = arith.constant dense<0.000000e+00> : vector<8xf32>
    %72 = vector.multi_reduction <add>, %71, %cst_46 [1] : vector<8x32xf32> to vector<8xf32>
    %73 = vector.shape_cast %72 : vector<8xf32> to vector<8x1xf32>
    %cst_47 = arith.constant 3.200000e+01 : f32
    %74 = vector.broadcast %cst_47 : f32 to vector<8x1xf32>
    %75 = arith.divf %73, %74 : vector<8x1xf32>
    %cst_48 = arith.constant 9.99999974E-6 : f32
    %76 = vector.broadcast %cst_48 : f32 to vector<8x1xf32>
    %77 = arith.addf %75, %76 : vector<8x1xf32>
    %78 = math.rsqrt %77 : vector<8x1xf32>
    %79 = vector.broadcast %78 : vector<8x1xf32> to vector<8x32xf32>
    %80 = arith.mulf %70, %79 : vector<8x32xf32>
    %81 = vector.broadcast %63 : vector<1x32xf32> to vector<8x32xf32>
    %82 = arith.mulf %80, %81 : vector<8x32xf32>
    %83 = vector.broadcast %64 : vector<1x32xf32> to vector<8x32xf32>
    %84 = arith.addf %82, %83 : vector<8x32xf32>
    %85 = vector.shape_cast %84 : vector<8x32xf32> to vector<1x8x32xf32>
    %c0_49 = arith.constant 0 : index
    %c0_50 = arith.constant 0 : index
    %c0_51 = arith.constant 0 : index
    %86 = vector.load %arg16[%c0_49, %c0_50, %c0_51] : memref<1x8x32xf32, #tpu.memory_space<vmem>>, vector<1x8x32xf32>
    tpu.vector_store %arg16[%c0_49, %c0_50, %c0_51], %85 {strides = array<i32>} : memref<1x8x32xf32, #tpu.memory_space<vmem>>, vector<1x8x32xf32>,
    return
  }
  func.func @transform_0(%arg0: i32) -> (i32, i32, i32) {
    %c0_i32 = arith.constant 0 : i32
    %c0_i32_0 = arith.constant 0 : i32
    %c0_i32_1 = arith.constant 0 : i32
    return %arg0, %c0_i32, %c0_i32_0 : i32, i32, i32
  }
  func.func @transform_1(%arg0: i32) -> (i32, i32) {
    %c0_i32 = arith.constant 0 : i32
    %c0_i32_0 = arith.constant 0 : i32
    %c0_i32_1 = arith.constant 0 : i32
    return %c0_i32, %c0_i32_0 : i32, i32
  }
  func.func @transform_2(%arg0: i32) -> (i32, i32) {
    %c0_i32 = arith.constant 0 : i32
    %c0_i32_0 = arith.constant 0 : i32
    %c0_i32_1 = arith.constant 0 : i32
    return %c0_i32, %c0_i32_0 : i32, i32
  }
  func.func @transform_3(%arg0: i32) -> (i32, i32) {
    %c0_i32 = arith.constant 0 : i32
    %c0_i32_0 = arith.constant 0 : i32
    %c0_i32_1 = arith.constant 0 : i32
    return %c0_i32, %c0_i32_0 : i32, i32
  }
  func.func @transform_4(%arg0: i32) -> (i32, i32) {
    %c0_i32 = arith.constant 0 : i32
    %c0_i32_0 = arith.constant 0 : i32
    %c0_i32_1 = arith.constant 0 : i32
    return %c0_i32, %c0_i32_0 : i32, i32
  }
  func.func @transform_5(%arg0: i32) -> (i32, i32) {
    %c0_i32 = arith.constant 0 : i32
    %c0_i32_0 = arith.constant 0 : i32
    %c0_i32_1 = arith.constant 0 : i32
    return %c0_i32, %c0_i32_0 : i32, i32
  }
  func.func @transform_6(%arg0: i32) -> (i32, i32) {
    %c0_i32 = arith.constant 0 : i32
    %c0_i32_0 = arith.constant 0 : i32
    %c0_i32_1 = arith.constant 0 : i32
    return %c0_i32, %c0_i32_0 : i32, i32
  }
  func.func @transform_7(%arg0: i32) -> (i32, i32) {
    %c0_i32 = arith.constant 0 : i32
    %c0_i32_0 = arith.constant 0 : i32
    %c0_i32_1 = arith.constant 0 : i32
    return %c0_i32, %c0_i32_0 : i32, i32
  }
  func.func @transform_8(%arg0: i32) -> (i32, i32) {
    %c0_i32 = arith.constant 0 : i32
    %c0_i32_0 = arith.constant 0 : i32
    %c0_i32_1 = arith.constant 0 : i32
    return %c0_i32, %c0_i32_0 : i32, i32
  }
  func.func @transform_9(%arg0: i32) -> (i32, i32) {
    %c0_i32 = arith.constant 0 : i32
    %c0_i32_0 = arith.constant 0 : i32
    %c0_i32_1 = arith.constant 0 : i32
    return %c0_i32, %c0_i32_0 : i32, i32
  }
  func.func @transform_10(%arg0: i32) -> (i32, i32) {
    %c0_i32 = arith.constant 0 : i32
    %c0_i32_0 = arith.constant 0 : i32
    %c0_i32_1 = arith.constant 0 : i32
    return %c0_i32, %c0_i32_0 : i32, i32
  }
  func.func @transform_11(%arg0: i32) -> (i32, i32) {
    %c0_i32 = arith.constant 0 : i32
    %c0_i32_0 = arith.constant 0 : i32
    %c0_i32_1 = arith.constant 0 : i32
    return %c0_i32, %c0_i32_0 : i32, i32
  }
  func.func @transform_12(%arg0: i32) -> (i32, i32) {
    %c0_i32 = arith.constant 0 : i32
    %c0_i32_0 = arith.constant 0 : i32
    %c0_i32_1 = arith.constant 0 : i32
    return %c0_i32, %c0_i32_0 : i32, i32
  }
  func.func @transform_13(%arg0: i32) -> (i32, i32) {
    %c0_i32 = arith.constant 0 : i32
    %c0_i32_0 = arith.constant 0 : i32
    %c0_i32_1 = arith.constant 0 : i32
    return %c0_i32, %c0_i32_0 : i32, i32
  }
  func.func @transform_14(%arg0: i32) -> (i32, i32) {
    %c0_i32 = arith.constant 0 : i32
    %c0_i32_0 = arith.constant 0 : i32
    %c0_i32_1 = arith.constant 0 : i32
    return %c0_i32, %c0_i32_0 : i32, i32
  }
  func.func @transform_15(%arg0: i32) -> (i32, i32, i32) {
    %c0_i32 = arith.constant 0 : i32
    %c0_i32_0 = arith.constant 0 : i32
    %c0_i32_1 = arith.constant 0 : i32
    return %arg0, %c0_i32, %c0_i32_0 : i32, i32, i32
  }
}

</mosaic_0001>

<llo_original>
// kernel: tpu_custom_call.1
$region0: #{tpu_custom_call.1}
  #allocation0 [shape = 'u32[]', space=smem, size = 0x4, offset = 0x4, fixed_abs, tag = 'smem constant byte address 0x4 - core index']
  #allocation1 [shape = 'u32[72,128]{1,0:T(1,128)}', space=vmem, size = 0x9000, scoped, tag = 'internal scratch']
  %s0 = inlined_call_operand.hbm [shape: f32[2,8,32], index: 0, kind: input, shape index: {}]
  %s1 = inlined_call_operand.vmem [shape: f32[32,32], index: 1, kind: input, shape index: {}]
  %s2 = inlined_call_operand.vmem [shape: f32[1,32], index: 2, kind: input, shape index: {}]
  %s3 = inlined_call_operand.vmem [shape: f32[32,32], index: 3, kind: input, shape index: {}]
  %s4 = inlined_call_operand.vmem [shape: f32[1,32], index: 4, kind: input, shape index: {}]
  %s5 = inlined_call_operand.vmem [shape: f32[32,32], index: 5, kind: input, shape index: {}]
  %s6 = inlined_call_operand.vmem [shape: f32[1,32], index: 6, kind: input, shape index: {}]
  %s7 = inlined_call_operand.vmem [shape: f32[1,32], index: 7, kind: input, shape index: {}]
  %s8 = inlined_call_operand.vmem [shape: f32[1,32], index: 8, kind: input, shape index: {}]
  %s9 = inlined_call_operand.hbm [shape: f32[32,64], index: 9, kind: input, shape index: {}]
  %s10 = inlined_call_operand.vmem [shape: f32[1,64], index: 10, kind: input, shape index: {}]
  %s11 = inlined_call_operand.vmem [shape: f32[64,32], index: 11, kind: input, shape index: {}]
  %s12 = inlined_call_operand.vmem [shape: f32[1,32], index: 12, kind: input, shape index: {}]
  %s13 = inlined_call_operand.vmem [shape: f32[1,32], index: 13, kind: input, shape index: {}]
  %s14 = inlined_call_operand.vmem [shape: f32[1,32], index: 14, kind: input, shape index: {}]
  %s15 = inlined_call_operand.hbm [shape: f32[2,8,32], index: 15, kind: output, shape index: {}]
  %s16 = sld [smem:[#allocation0]]
  $region101: #{tpu_custom_call.1} parent=0
    _
  %s18 = ssub.s32 1, %s16
  %s19 = scalar_select 0, %s18, %s16
  $region1: #{tpu_custom_call.1} parent=0
    #allocation2 [shape = 'u8[8192]{0}', space=vmem, size = 0x2000, scoped, tag = 'input window, operand 0']
    #allocation3 [shape = 's32[2]{0}', space=sflag, size = 0x8, scoped, tag = 'scoped memory for tpu_custom_call.1']
    #allocation4 [shape = 's32[2]{0}', space=sflag, size = 0x8, scoped, tag = 'scoped memory for tpu_custom_call.1']
    #allocation5 [shape = 'u8[16384]{0}', space=vmem, size = 0x4000, scoped, tag = 'input window, operand 9, single buffered']
    #allocation6 [shape = 's32[1]{0}', space=sflag, size = 0x4, scoped, tag = 'scoped memory for tpu_custom_call.1']
    #allocation7 [shape = 'u8[8192]{0}', space=vmem, size = 0x2000, scoped, tag = 'output window, operand 0']
    %20 = vsyncpa [#allocation3], 0
    %s21 = scalar_lea.sflag [#allocation3], 1
    %22 = vsyncpa %s21, 0
    %23 = vsyncpa [#allocation6], 0
    %24 = vsyncpa [#allocation4], 0
    %s25 = scalar_lea.sflag [#allocation4], 1
    %26 = vsyncpa %s25, 0
    loop: start=0, step=1, limit=4
    $region2: #{tpu_custom_call.1} parent=1 // loop_pre_header
      _
    $region3: #{tpu_custom_call.1} parent=1 // loop_header
      %s28 = sphi 0, %s32
      %p29 = scmp.ge.s32.totalorder %s28, 4
      %s38 = sphi 0, %s40
      %s41 = sphi 0, %s38
      %s42 = sphi 0, %s41
      %s58 = sphi 0, %s42
      %s62 = sphi 0, %s62
      %s64 = sphi 0, %s62
      %s65 = sphi 0, %s64
      %s79 = sphi 0, %s65
      %s83 = sphi 0, %s83
      %s85 = sphi 0, %s83
      %s86 = sphi 0, %s85
      %s100 = sphi 0, %s86
      %s104 = sphi 0, %s104
      %s106 = sphi 0, %s104
      %s107 = sphi 0, %s106
      %s121 = sphi 0, %s107
      %s125 = sphi 0, %s125
      %s127 = sphi 0, %s125
      %s128 = sphi 0, %s127
      %s142 = sphi 0, %s128
      %s146 = sphi 0, %s146
      %s148 = sphi 0, %s146
      %s149 = sphi 0, %s148
      %s163 = sphi 0, %s149
      %s167 = sphi 0, %s167
      %s169 = sphi 0, %s167
      %s170 = sphi 0, %s169
      %s184 = sphi 0, %s170
      %s188 = sphi 0, %s188
      %s190 = sphi 0, %s188
      %s191 = sphi 0, %s190
      %s205 = sphi 0, %s191
      %s209 = sphi 0, %s209
      %s211 = sphi 0, %s209
      %s212 = sphi 0, %s211
      %s226 = sphi 0, %s212
      %s230 = sphi 0, %s230
      %s232 = sphi 0, %s230
      %s233 = sphi 0, %s232
      %s247 = sphi 0, %s233
      %s251 = sphi 0, %s251
      %s253 = sphi 0, %s251
      %s254 = sphi 0, %s253
      %s268 = sphi 0, %s254
      %s272 = sphi 0, %s272
      %s274 = sphi 0, %s272
      %s275 = sphi 0, %s274
      %s289 = sphi 0, %s275
      %s293 = sphi 0, %s293
      %s295 = sphi 0, %s293
      %s296 = sphi 0, %s295
      %s310 = sphi 0, %s296
      %s314 = sphi 0, %s314
      %s316 = sphi 0, %s314
      %s317 = sphi 0, %s316
      %s331 = sphi 0, %s317
      %s335 = sphi 0, %s335
      %s337 = sphi 0, %s335
      %s338 = sphi 0, %s337
      %s352 = sphi 0, %s338
      %s358 = sphi 0, %s360
      %s361 = sphi 0, %s358
      %s362 = sphi 0, %s361
      %s378 = sphi 0, %s362
    $region4: #{tpu_custom_call.1} parent=1 // loop_header_branch
      %31 = sbr.rel (%p29) target = $region8
    $region5: #{tpu_custom_call.1} parent=1 // loop_body
      %s33 = ssub.s32 %s28, 1
      %s34 = ssub.s32 %s28, 2
      %s35 = sadd.s32 %s28, 1
      %s36 = ssub.s32 %s28, %s35
      %p37 = scmp.eq.s32.totalorder %s36, 0
      %s39 = sadd.s32 %s38, 1
      %s40 = scalar_select %p37, %s38, %s39
      %p43 = pneg %p37
      %p44 = scmp.eq.s32.totalorder %s28, 1
      %p45 = por %p43, %p44
      %p46 = scmp.ne.s32.totalorder %s38, %s41
      %p47 = scmp.eq.s32.totalorder %s28, 0
      %p48 = por %p46, %p47
      %p49 = scmp.ne.s32.totalorder %s38, %s41
      %p50 = scmp.eq.s32.totalorder %s33, 1
      %p51 = por %p49, %p50
      %p52 = scmp.ne.s32.totalorder %s41, %s42
      %p53 = scmp.eq.s32.totalorder %s33, 0
      %p54 = por %p52, %p53
      %p55 = scmp.ne.s32.totalorder %s41, %s42
      %p56 = scmp.eq.s32.totalorder %s34, 1
      %p57 = por %p55, %p56
      %p59 = scmp.ne.s32.totalorder %s42, %s58
      %p60 = scmp.eq.s32.totalorder %s34, 0
      %p61 = por %p59, %p60
      %s63 = sadd.s32 %s62, 1
      %p66 = scmp.eq.s32.totalorder %s28, 1
      %p67 = scmp.ne.s32.totalorder %s62, %s64
      %p68 = scmp.eq.s32.totalorder %s28, 0
      %p69 = por %p67, %p68
      %p70 = scmp.ne.s32.totalorder %s62, %s64
      %p71 = scmp.eq.s32.totalorder %s33, 1
      %p72 = por %p70, %p71
      %p73 = scmp.ne.s32.totalorder %s64, %s65
      %p74 = scmp.eq.s32.totalorder %s33, 0
      %p75 = por %p73, %p74
      %p76 = scmp.ne.s32.totalorder %s64, %s65
      %p77 = scmp.eq.s32.totalorder %s34, 1
      %p78 = por %p76, %p77
      %p80 = scmp.ne.s32.totalorder %s65, %s79
      %p81 = scmp.eq.s32.totalorder %s34, 0
      %p82 = por %p80, %p81
      %s84 = sadd.s32 %s83, 1
      %p87 = scmp.eq.s32.totalorder %s28, 1
      %p88 = scmp.ne.s32.totalorder %s83, %s85
      %p89 = scmp.eq.s32.totalorder %s28, 0
      %p90 = por %p88, %p89
      %p91 = scmp.ne.s32.totalorder %s83, %s85
      %p92 = scmp.eq.s32.totalorder %s33, 1
      %p93 = por %p91, %p92
      %p94 = scmp.ne.s32.totalorder %s85, %s86
      %p95 = scmp.eq.s32.totalorder %s33, 0
      %p96 = por %p94, %p95
      %p97 = scmp.ne.s32.totalorder %s85, %s86
      %p98 = scmp.eq.s32.totalorder %s34, 1
      %p99 = por %p97, %p98
      %p101 = scmp.ne.s32.totalorder %s86, %s100
      %p102 = scmp.eq.s32.totalorder %s34, 0
      %p103 = por %p101, %p102
      %s105 = sadd.s32 %s104, 1
      %p108 = scmp.eq.s32.totalorder %s28, 1
      %p109 = scmp.ne.s32.totalorder %s104, %s106
      %p110 = scmp.eq.s32.totalorder %s28, 0
      %p111 = por %p109, %p110
      %p112 = scmp.ne.s32.totalorder %s104, %s106
      %p113 = scmp.eq.s32.totalorder %s33, 1
      %p114 = por %p112, %p113
      %p115 = scmp.ne.s32.totalorder %s106, %s107
      %p116 = scmp.eq.s32.totalorder %s33, 0
      %p117 = por %p115, %p116
      %p118 = scmp.ne.s32.totalorder %s106, %s107
      %p119 = scmp.eq.s32.totalorder %s34, 1
      %p120 = por %p118, %p119
      %p122 = scmp.ne.s32.totalorder %s107, %s121
      %p123 = scmp.eq.s32.totalorder %s34, 0
      %p124 = por %p122, %p123
      %s126 = sadd.s32 %s125, 1
      %p129 = scmp.eq.s32.totalorder %s28, 1
      %p130 = scmp.ne.s32.totalorder %s125, %s127
      %p131 = scmp.eq.s32.totalorder %s28, 0
      %p132 = por %p130, %p131
      %p133 = scmp.ne.s32.totalorder %s125, %s127
      %p134 = scmp.eq.s32.totalorder %s33, 1
      %p135 = por %p133, %p134
      %p136 = scmp.ne.s32.totalorder %s127, %s128
      %p137 = scmp.eq.s32.totalorder %s33, 0
      %p138 = por %p136, %p137
      %p139 = scmp.ne.s32.totalorder %s127, %s128
      %p140 = scmp.eq.s32.totalorder %s34, 1
      %p141 = por %p139, %p140
      %p143 = scmp.ne.s32.totalorder %s128, %s142
      %p144 = scmp.eq.s32.totalorder %s34, 0
      %p145 = por %p143, %p144
      %s147 = sadd.s32 %s146, 1
      %p150 = scmp.eq.s32.totalorder %s28, 1
      %p151 = scmp.ne.s32.totalorder %s146, %s148
      %p152 = scmp.eq.s32.totalorder %s28, 0
      %p153 = por %p151, %p152
      %p154 = scmp.ne.s32.totalorder %s146, %s148
      %p155 = scmp.eq.s32.totalorder %s33, 1
      %p156 = por %p154, %p155
      %p157 = scmp.ne.s32.totalorder %s148, %s149
      %p158 = scmp.eq.s32.totalorder %s33, 0
      %p159 = por %p157, %p158
      %p160 = scmp.ne.s32.totalorder %s148, %s149
      %p161 = scmp.eq.s32.totalorder %s34, 1
      %p162 = por %p160, %p161
      %p164 = scmp.ne.s32.totalorder %s149, %s163
      %p165 = scmp.eq.s32.totalorder %s34, 0
      %p166 = por %p164, %p165
      %s168 = sadd.s32 %s167, 1
      %p171 = scmp.eq.s32.totalorder %s28, 1
      %p172 = scmp.ne.s32.totalorder %s167, %s169
      %p173 = scmp.eq.s32.totalorder %s28, 0
      %p174 = por %p172, %p173
      %p175 = scmp.ne.s32.totalorder %s167, %s169
      %p176 = scmp.eq.s32.totalorder %s33, 1
      %p177 = por %p175, %p176
      %p178 = scmp.ne.s32.totalorder %s169, %s170
      %p179 = scmp.eq.s32.totalorder %s33, 0
      %p180 = por %p178, %p179
      %p181 = scmp.ne.s32.totalorder %s169, %s170
      %p182 = scmp.eq.s32.totalorder %s34, 1
      %p183 = por %p181, %p182
      %p185 = scmp.ne.s32.totalorder %s170, %s184
      %p186 = scmp.eq.s32.totalorder %s34, 0
      %p187 = por %p185, %p186
      %s189 = sadd.s32 %s188, 1
      %p192 = scmp.eq.s32.totalorder %s28, 1
      %p193 = scmp.ne.s32.totalorder %s188, %s190
      %p194 = scmp.eq.s32.totalorder %s28, 0
      %p195 = por %p193, %p194
      %p196 = scmp.ne.s32.totalorder %s188, %s190
      %p197 = scmp.eq.s32.totalorder %s33, 1
      %p198 = por %p196, %p197
      %p199 = scmp.ne.s32.totalorder %s190, %s191
      %p200 = scmp.eq.s32.totalorder %s33, 0
      %p201 = por %p199, %p200
      %p202 = scmp.ne.s32.totalorder %s190, %s191
      %p203 = scmp.eq.s32.totalorder %s34, 1
      %p204 = por %p202, %p203
      %p206 = scmp.ne.s32.totalorder %s191, %s205
      %p207 = scmp.eq.s32.totalorder %s34, 0
      %p208 = por %p206, %p207
      %s210 = sadd.s32 %s209, 1
      %p213 = scmp.eq.s32.totalorder %s28, 1
      %p214 = scmp.ne.s32.totalorder %s209, %s211
      %p215 = scmp.eq.s32.totalorder %s28, 0
      %p216 = por %p214, %p215
      %p217 = scmp.ne.s32.totalorder %s209, %s211
      %p218 = scmp.eq.s32.totalorder %s33, 1
      %p219 = por %p217, %p218
      %p220 = scmp.ne.s32.totalorder %s211, %s212
      %p221 = scmp.eq.s32.totalorder %s33, 0
      %p222 = por %p220, %p221
      %p223 = scmp.ne.s32.totalorder %s211, %s212
      %p224 = scmp.eq.s32.totalorder %s34, 1
      %p225 = por %p223, %p224
      %p227 = scmp.ne.s32.totalorder %s212, %s226
      %p228 = scmp.eq.s32.totalorder %s34, 0
      %p229 = por %p227, %p228
      %s231 = sadd.s32 %s230, 1
      %p234 = scmp.eq.s32.totalorder %s28, 1
      %p235 = scmp.ne.s32.totalorder %s230, %s232
      %p236 = scmp.eq.s32.totalorder %s28, 0
      %p237 = por %p235, %p236
      %p238 = scmp.ne.s32.totalorder %s230, %s232
      %p239 = scmp.eq.s32.totalorder %s33, 1
      %p240 = por %p238, %p239
      %p241 = scmp.ne.s32.totalorder %s232, %s233
      %p242 = scmp.eq.s32.totalorder %s33, 0
      %p243 = por %p241, %p242
      %p244 = scmp.ne.s32.totalorder %s232, %s233
      %p245 = scmp.eq.s32.totalorder %s34, 1
      %p246 = por %p244, %p245
      %p248 = scmp.ne.s32.totalorder %s233, %s247
      %p249 = scmp.eq.s32.totalorder %s34, 0
      %p250 = por %p248, %p249
      %s252 = sadd.s32 %s251, 1
      %p255 = scmp.eq.s32.totalorder %s28, 1
      %p256 = scmp.ne.s32.totalorder %s251, %s253
      %p257 = scmp.eq.s32.totalorder %s28, 0
      %p258 = por %p256, %p257
      %p259 = scmp.ne.s32.totalorder %s251, %s253
      %p260 = scmp.eq.s32.totalorder %s33, 1
      %p261 = por %p259, %p260
      %p262 = scmp.ne.s32.totalorder %s253, %s254
      %p263 = scmp.eq.s32.totalorder %s33, 0
      %p264 = por %p262, %p263
      %p265 = scmp.ne.s32.totalorder %s253, %s254
      %p266 = scmp.eq.s32.totalorder %s34, 1
      %p267 = por %p265, %p266
      %p269 = scmp.ne.s32.totalorder %s254, %s268
      %p270 = scmp.eq.s32.totalorder %s34, 0
      %p271 = por %p269, %p270
      %s273 = sadd.s32 %s272, 1
      %p276 = scmp.eq.s32.totalorder %s28, 1
      %p277 = scmp.ne.s32.totalorder %s272, %s274
      %p278 = scmp.eq.s32.totalorder %s28, 0
      %p279 = por %p277, %p278
      %p280 = scmp.ne.s32.totalorder %s272, %s274
      %p281 = scmp.eq.s32.totalorder %s33, 1
      %p282 = por %p280, %p281
      %p283 = scmp.ne.s32.totalorder %s274, %s275
      %p284 = scmp.eq.s32.totalorder %s33, 0
      %p285 = por %p283, %p284
      %p286 = scmp.ne.s32.totalorder %s274, %s275
      %p287 = scmp.eq.s32.totalorder %s34, 1
      %p288 = por %p286, %p287
      %p290 = scmp.ne.s32.totalorder %s275, %s289
      %p291 = scmp.eq.s32.totalorder %s34, 0
      %p292 = por %p290, %p291
      %s294 = sadd.s32 %s293, 1
      %p297 = scmp.eq.s32.totalorder %s28, 1
      %p298 = scmp.ne.s32.totalorder %s293, %s295
      %p299 = scmp.eq.s32.totalorder %s28, 0
      %p300 = por %p298, %p299
      %p301 = scmp.ne.s32.totalorder %s293, %s295
      %p302 = scmp.eq.s32.totalorder %s33, 1
      %p303 = por %p301, %p302
      %p304 = scmp.ne.s32.totalorder %s295, %s296
      %p305 = scmp.eq.s32.totalorder %s33, 0
      %p306 = por %p304, %p305
      %p307 = scmp.ne.s32.totalorder %s295, %s296
      %p308 = scmp.eq.s32.totalorder %s34, 1
      %p309 = por %p307, %p308
      %p311 = scmp.ne.s32.totalorder %s296, %s310
      %p312 = scmp.eq.s32.totalorder %s34, 0
      %p313 = por %p311, %p312
      %s315 = sadd.s32 %s314, 1
      %p318 = scmp.eq.s32.totalorder %s28, 1
      %p319 = scmp.ne.s32.totalorder %s314, %s316
      %p320 = scmp.eq.s32.totalorder %s28, 0
      %p321 = por %p319, %p320
      %p322 = scmp.ne.s32.totalorder %s314, %s316
      %p323 = scmp.eq.s32.totalorder %s33, 1
      %p324 = por %p322, %p323
      %p325 = scmp.ne.s32.totalorder %s316, %s317
      %p326 = scmp.eq.s32.totalorder %s33, 0
      %p327 = por %p325, %p326
      %p328 = scmp.ne.s32.totalorder %s316, %s317
      %p329 = scmp.eq.s32.totalorder %s34, 1
      %p330 = por %p328, %p329
      %p332 = scmp.ne.s32.totalorder %s317, %s331
      %p333 = scmp.eq.s32.totalorder %s34, 0
      %p334 = por %p332, %p333
      %s336 = sadd.s32 %s335, 1
      %p339 = scmp.eq.s32.totalorder %s28, 1
      %p340 = scmp.ne.s32.totalorder %s335, %s337
      %p341 = scmp.eq.s32.totalorder %s28, 0
      %p342 = por %p340, %p341
      %p343 = scmp.ne.s32.totalorder %s335, %s337
      %p344 = scmp.eq.s32.totalorder %s33, 1
      %p345 = por %p343, %p344
      %p346 = scmp.ne.s32.totalorder %s337, %s338
      %p347 = scmp.eq.s32.totalorder %s33, 0
      %p348 = por %p346, %p347
      %p349 = scmp.ne.s32.totalorder %s337, %s338
      %p350 = scmp.eq.s32.totalorder %s34, 1
      %p351 = por %p349, %p350
      %p353 = scmp.ne.s32.totalorder %s338, %s352
      %p354 = scmp.eq.s32.totalorder %s34, 0
      %p355 = por %p353, %p354
      %s356 = ssub.s32 %s28, %s35
      %p357 = scmp.eq.s32.totalorder %s356, 0
      %s359 = sadd.s32 %s358, 1
      %s360 = scalar_select %p357, %s358, %s359
      %p363 = pneg %p357
      %p364 = scmp.eq.s32.totalorder %s28, 1
      %p365 = por %p363, %p364
      %p366 = scmp.ne.s32.totalorder %s358, %s361
      %p367 = scmp.eq.s32.totalorder %s28, 0
      %p368 = por %p366, %p367
      %p369 = scmp.ne.s32.totalorder %s358, %s361
      %p370 = scmp.eq.s32.totalorder %s33, 1
      %p371 = por %p369, %p370
      %p372 = scmp.ne.s32.totalorder %s361, %s362
      %p373 = scmp.eq.s32.totalorder %s33, 0
      %p374 = por %p372, %p373
      %p375 = scmp.ne.s32.totalorder %s361, %s362
      %p376 = scmp.eq.s32.totalorder %s34, 1
      %p377 = por %p375, %p376
      %p379 = scmp.ne.s32.totalorder %s362, %s378
      %p380 = scmp.eq.s32.totalorder %s34, 0
      %p381 = por %p379, %p380
      %p382 = scmp.le.s32.totalorder 1, %s28
      %p383 = scmp.lt.s32.totalorder %s28, 3
      %p384 = pnand %p382, %p383
      %p385 = pneg %p384
      // Predicated region
      $region9: #{tpu_custom_call.1} parent=5 // pred_check
        _
      $region10: #{tpu_custom_call.1} parent=5 // pred_check_branch
        %387 = sbr.rel (%p384) target = $region12
      $region11: #{tpu_custom_call.1} parent=5 // pred_region
        %s388 = ssub.s32 %s28, 1
        // Predicated region
        $region13: #{tpu_custom_call.1} parent=11 // pred_check
          %p389 = pneg %p75
        $region14: #{tpu_custom_call.1} parent=11 // pred_check_branch
          %391 = sbr.rel (%p389) target = $region16
        $region15: #{tpu_custom_call.1} parent=11 // pred_region
          _
        $region16: #{tpu_custom_call.1} parent=11 // pred_fallthru
          _
        // Predicated region
        $region17: #{tpu_custom_call.1} parent=11 // pred_check
          %p392 = pneg %p96
        $region18: #{tpu_custom_call.1} parent=11 // pred_check_branch
          %394 = sbr.rel (%p392) target = $region20
        $region19: #{tpu_custom_call.1} parent=11 // pred_region
          _
        $region20: #{tpu_custom_call.1} parent=11 // pred_fallthru
          _
        // Predicated region
        $region21: #{tpu_custom_call.1} parent=11 // pred_check
          %p395 = pneg %p117
        $region22: #{tpu_custom_call.1} parent=11 // pred_check_branch
          %397 = sbr.rel (%p395) target = $region24
        $region23: #{tpu_custom_call.1} parent=11 // pred_region
          _
        $region24: #{tpu_custom_call.1} parent=11 // pred_fallthru
          _
        // Predicated region
        $region25: #{tpu_custom_call.1} parent=11 // pred_check
          %p398 = pneg %p138
        $region26: #{tpu_custom_call.1} parent=11 // pred_check_branch
          %400 = sbr.rel (%p398) target = $region28
        $region27: #{tpu_custom_call.1} parent=11 // pred_region
          _
        $region28: #{tpu_custom_call.1} parent=11 // pred_fallthru
          _
        // Predicated region
        $region29: #{tpu_custom_call.1} parent=11 // pred_check
          %p401 = pneg %p159
        $region30: #{tpu_custom_call.1} parent=11 // pred_check_branch
          %403 = sbr.rel (%p401) target = $region32
        $region31: #{tpu_custom_call.1} parent=11 // pred_region
          _
        $region32: #{tpu_custom_call.1} parent=11 // pred_fallthru
          _
        // Predicated region
        $region33: #{tpu_custom_call.1} parent=11 // pred_check
          %p404 = pneg %p180
        $region34: #{tpu_custom_call.1} parent=11 // pred_check_branch
          %406 = sbr.rel (%p404) target = $region36
        $region35: #{tpu_custom_call.1} parent=11 // pred_region
          _
        $region36: #{tpu_custom_call.1} parent=11 // pred_fallthru
          _
        // Predicated region
        $region37: #{tpu_custom_call.1} parent=11 // pred_check
          %p407 = pneg %p201
        $region38: #{tpu_custom_call.1} parent=11 // pred_check_branch
          %409 = sbr.rel (%p407) target = $region40
        $region39: #{tpu_custom_call.1} parent=11 // pred_region
          _
        $region40: #{tpu_custom_call.1} parent=11 // pred_fallthru
          _
        // Predicated region
        $region41: #{tpu_custom_call.1} parent=11 // pred_check
          %p410 = pneg %p222
        $region42: #{tpu_custom_call.1} parent=11 // pred_check_branch
          %412 = sbr.rel (%p410) target = $region44
        $region43: #{tpu_custom_call.1} parent=11 // pred_region
          _
        $region44: #{tpu_custom_call.1} parent=11 // pred_fallthru
          _
        // Predicated region
        $region45: #{tpu_custom_call.1} parent=11 // pred_check
          %p413 = pneg %p243
        $region46: #{tpu_custom_call.1} parent=11 // pred_check_branch
          %415 = sbr.rel (%p413) target = $region48
        $region47: #{tpu_custom_call.1} parent=11 // pred_region
          %417 = vsyncadd [#allocation6], 0
          %s418 = sshll.u32 %s9, 4
          %s419 = int_to_ptr.hbm [resolvable:$true] %s418
          %s420 = sshll.u32 [#allocation5], 4
          %s421 = int_to_ptr.vmem [resolvable:$true] %s420
          %426 = dma.hbm_to_vmem [thread:$0]  %s419, 512, %s421, [#allocation6], 128, 128, 8
        $region48: #{tpu_custom_call.1} parent=11 // pred_fallthru
          _
        // Predicated region
        $region49: #{tpu_custom_call.1} parent=11 // pred_check
          %p427 = pneg %p264
        $region50: #{tpu_custom_call.1} parent=11 // pred_check_branch
          %429 = sbr.rel (%p427) target = $region52
        $region51: #{tpu_custom_call.1} parent=11 // pred_region
          _
        $region52: #{tpu_custom_call.1} parent=11 // pred_fallthru
          _
        // Predicated region
        $region53: #{tpu_custom_call.1} parent=11 // pred_check
          %p430 = pneg %p285
        $region54: #{tpu_custom_call.1} parent=11 // pred_check_branch
          %432 = sbr.rel (%p430) target = $region56
        $region55: #{tpu_custom_call.1} parent=11 // pred_region
          _
        $region56: #{tpu_custom_call.1} parent=11 // pred_fallthru
          _
        // Predicated region
        $region57: #{tpu_custom_call.1} parent=11 // pred_check
          %p433 = pneg %p306
        $region58: #{tpu_custom_call.1} parent=11 // pred_check_branch
          %435 = sbr.rel (%p433) target = $region60
        $region59: #{tpu_custom_call.1} parent=11 // pred_region
          _
        $region60: #{tpu_custom_call.1} parent=11 // pred_fallthru
          _
        // Predicated region
        $region61: #{tpu_custom_call.1} parent=11 // pred_check
          %p436 = pneg %p327
        $region62: #{tpu_custom_call.1} parent=11 // pred_check_branch
          %438 = sbr.rel (%p436) target = $region64
        $region63: #{tpu_custom_call.1} parent=11 // pred_region
          _
        $region64: #{tpu_custom_call.1} parent=11 // pred_fallthru
          _
        // Predicated region
        $region65: #{tpu_custom_call.1} parent=11 // pred_check
          %p439 = pneg %p348
        $region66: #{tpu_custom_call.1} parent=11 // pred_check_branch
          %441 = sbr.rel (%p439) target = $region68
        $region67: #{tpu_custom_call.1} parent=11 // pred_region
          _
        $region68: #{tpu_custom_call.1} parent=11 // pred_fallthru
          _
      $region12: #{tpu_custom_call.1} parent=5 // pred_fallthru
        _
      %p442 = scmp.lt.s32.totalorder %s28, 2
      // Predicated region
      $region69: #{tpu_custom_call.1} parent=5 // pred_check
        %p443 = pneg %p442
      $region70: #{tpu_custom_call.1} parent=5 // pred_check_branch
        %445 = sbr.rel (%p443) target = $region72
      $region71: #{tpu_custom_call.1} parent=5 // pred_region
        // Predicated region
        $region73: #{tpu_custom_call.1} parent=71 // pred_check
          %p446 = pneg %p48
        $region74: #{tpu_custom_call.1} parent=71 // pred_check_branch
          %448 = sbr.rel (%p446) target = $region76
        $region75: #{tpu_custom_call.1} parent=71 // pred_region
          %s449 = sand.u32 %s38, 1
          %s450 = scalar_lea.sflag [#allocation3], %s449
          %s451 = sand.u32 %s38, 1
          %s452 = smul.addr %s451, 8
          %s453 = scalar_lea.vmem [#allocation2], %s452
          %455 = vsyncadd %s450, 0
          %s456 = smul.addr %s28, 8
          %s457 = scalar_lea.hbm %s0, %s456
          %s459 = sshll.u32 %s457, 4
          %s460 = int_to_ptr.hbm [resolvable:$true] %s459
          %s461 = sshll.u32 %s453, 4
          %s462 = int_to_ptr.vmem [resolvable:$true] %s461
          %464 = dma.hbm_to_vmem [thread:$0]  %s460, 128, %s462, %s450
        $region76: #{tpu_custom_call.1} parent=71 // pred_fallthru
          _
      $region72: #{tpu_custom_call.1} parent=5 // pred_fallthru
        _
      %p465 = scmp.le.s32.totalorder 1, %s28
      %p466 = scmp.lt.s32.totalorder %s28, 3
      %p467 = pnand %p465, %p466
      %p468 = pneg %p467
      // Predicated region
      $region77: #{tpu_custom_call.1} parent=5 // pred_check
        _
      $region78: #{tpu_custom_call.1} parent=5 // pred_check_branch
        %470 = sbr.rel (%p467) target = $region80
      $region79: #{tpu_custom_call.1} parent=5 // pred_region
        %s471 = ssub.s32 %s28, 1
        %s472 = sand.u32 %s41, 1
        %s473 = scalar_lea.sflag [#allocation3], %s472
        %s474 = sand.u32 %s41, 1
        %s475 = smul.addr %s474, 8
        %s476 = scalar_lea.vmem [#allocation2], %s475
        // Predicated region
        $region81: #{tpu_custom_call.1} parent=79 // pred_check
          %p477 = pneg %p54
        $region82: #{tpu_custom_call.1} parent=79 // pred_check_branch
          %479 = sbr.rel (%p477) target = $region84
        $region83: #{tpu_custom_call.1} parent=79 // pred_region
          %481 = dma.done %s473, 128
        $region84: #{tpu_custom_call.1} parent=79 // pred_fallthru
          _
        // Predicated region
        $region85: #{tpu_custom_call.1} parent=79 // pred_check
          %p482 = pneg %p243
        $region86: #{tpu_custom_call.1} parent=79 // pred_check_branch
          %484 = sbr.rel (%p482) target = $region88
        $region87: #{tpu_custom_call.1} parent=79 // pred_region
          %486 = dma.done [#allocation6], 512
        $region88: #{tpu_custom_call.1} parent=79 // pred_fallthru
          _
        %s487 = sand.u32 %s41, 1
        %s488 = scalar_lea.sflag [#allocation3], %s487
        %s489 = sand.u32 %s41, 1
        %s490 = smul.addr %s489, 8
        %s491 = scalar_lea.vmem [#allocation2], %s490
        %p492 = pneg %p54
        %p493 = pneg %p51
        %p494 = pneg %p75
        %p495 = pneg %p72
        %p496 = pneg %p96
        %p497 = pneg %p93
        %p498 = pneg %p117
        %p499 = pneg %p114
        %p500 = pneg %p138
        %p501 = pneg %p135
        %p502 = pneg %p159
        %p503 = pneg %p156
        %p504 = pneg %p180
        %p505 = pneg %p177
        %p506 = pneg %p201
        %p507 = pneg %p198
        %p508 = pneg %p222
        %p509 = pneg %p219
        %p510 = pneg %p243
        %p511 = pneg %p240
        %p512 = pneg %p264
        %p513 = pneg %p261
        %p514 = pneg %p285
        %p515 = pneg %p282
        %p516 = pneg %p306
        %p517 = pneg %p303
        %p518 = pneg %p327
        %p519 = pneg %p324
        %p520 = pneg %p348
        %p521 = pneg %p345
        %p522 = pneg %p374
        %p523 = pneg %p371
        %s524 = sand.u32 %s361, 1
        %s525 = scalar_lea.sflag [#allocation4], %s524
        %s526 = sand.u32 %s361, 1
        %s527 = smul.addr %s526, 8
        %s528 = scalar_lea.vmem [#allocation7], %s527
        %v529 = vld [vmem:[%s476] sm:$0xff]
        %v530 = vld [vmem:[%s1] sm:$0xff]
        %v531 = vld [vmem:[%s1 + $0x8] sm:$0xff]
        %v532 = vld [vmem:[%s1 + $0x10] sm:$0xff]
        %v533 = vld [vmem:[%s1 + $0x18] sm:$0xff]
        %v534 = vld [vmem:[%s2] sm:$0x1]
        %v536 = vperm.slane %v534, 0
        %vm538 = vcmask 261120
        %v540 = vsel %vm538, %v529, 0
        %542 = vmatpush.msra.mxu0 0.0
        %543 = vmatpush.msra.mxu0 0.0
        %544 = vmatpush.msra.mxu0 0.0
        %545 = vmatpush.msra.mxu0 0.0
        %546 = vmatpush.msra.mxu0 0.0
        %547 = vmatpush.msra.mxu0 0.0
        %548 = vmatpush.msra.mxu0 0.0
        %549 = vmatpush.msra.mxu0 0.0
        %550 = vmatpush.msra.mxu0 0.0
        %551 = vmatpush.msra.mxu0 0.0
        %552 = vmatpush.msra.mxu0 0.0
        %553 = vmatpush.msra.mxu0 0.0
        %554 = vmatpush.msra.mxu0 %v533
        %555 = vmatpush.msra.mxu0 %v532
        %556 = vmatpush.msra.mxu0 %v531
        %557 = vmatpush.msra.mxu0 %v530
        %558 = vmatmul.f32.gmra.mxu0 %v540
        %v559 = vpop.f32.mrf.mxu0
        %v560 = vadd.f32 %v536, %v559
        %561 = vdwg.mxu0
        %v562 = vld [vmem:[%s3] sm:$0xff]
        %v563 = vld [vmem:[%s3 + $0x8] sm:$0xff]
        %v564 = vld [vmem:[%s3 + $0x10] sm:$0xff]
        %v565 = vld [vmem:[%s3 + $0x18] sm:$0xff]
        %v566 = vld [vmem:[%s4] sm:$0x1]
        %v568 = vperm.slane %v566, 0
        %570 = vmatpush.msra.mxu0 0.0
        %571 = vmatpush.msra.mxu0 0.0
        %572 = vmatpush.msra.mxu0 0.0
        %573 = vmatpush.msra.mxu0 0.0
        %574 = vmatpush.msra.mxu0 0.0
        %575 = vmatpush.msra.mxu0 0.0
        %576 = vmatpush.msra.mxu0 0.0
        %577 = vmatpush.msra.mxu0 0.0
        %578 = vmatpush.msra.mxu0 0.0
        %579 = vmatpush.msra.mxu0 0.0
        %580 = vmatpush.msra.mxu0 0.0
        %581 = vmatpush.msra.mxu0 0.0
        %582 = vmatpush.msra.mxu0 %v565
        %583 = vmatpush.msra.mxu0 %v564
        %584 = vmatpush.msra.mxu0 %v563
        %585 = vmatpush.msra.mxu0 %v562
        %586 = vmatmul.f32.gmra.mxu0 %v540
        %v587 = vpop.f32.mrf.mxu0
        %v588 = vadd.f32 %v568, %v587
        %589 = vdwg.mxu0
        %v590 = vld [vmem:[%s5] sm:$0xff]
        %v591 = vld [vmem:[%s5 + $0x8] sm:$0xff]
        %v592 = vld [vmem:[%s5 + $0x10] sm:$0xff]
        %v593 = vld [vmem:[%s5 + $0x18] sm:$0xff]
        %v594 = vld [vmem:[%s6] sm:$0x1]
        %v596 = vperm.slane %v594, 0
        %598 = vmatpush.msra.mxu0 0.0
        %599 = vmatpush.msra.mxu0 0.0
        %600 = vmatpush.msra.mxu0 0.0
        %601 = vmatpush.msra.mxu0 0.0
        %602 = vmatpush.msra.mxu0 0.0
        %603 = vmatpush.msra.mxu0 0.0
        %604 = vmatpush.msra.mxu0 0.0
        %605 = vmatpush.msra.mxu0 0.0
        %606 = vmatpush.msra.mxu0 0.0
        %607 = vmatpush.msra.mxu0 0.0
        %608 = vmatpush.msra.mxu0 0.0
        %609 = vmatpush.msra.mxu0 0.0
        %610 = vmatpush.msra.mxu0 %v593
        %611 = vmatpush.msra.mxu0 %v592
        %612 = vmatpush.msra.mxu0 %v591
        %613 = vmatpush.msra.mxu0 %v590
        %614 = vmatmul.f32.gmra.mxu0 %v540
        %v615 = vpop.f32.mrf.mxu0
        %v616 = vadd.f32 %v596, %v615
        %617 = vdwg.mxu0
        %v619 = vsel %vm538, %v560, 0
        %v622 = vsel %vm538, %v588, 0
        %624 = vmatpush.xpose.msra.mxu0 0.0
        %625 = vmatpush.xpose.msra.mxu0 0.0
        %626 = vmatpush.xpose.msra.mxu0 0.0
        %627 = vmatpush.xpose.msra.mxu0 0.0
        %628 = vmatpush.xpose.msra.mxu0 0.0
        %629 = vmatpush.xpose.msra.mxu0 0.0
        %630 = vmatpush.xpose.msra.mxu0 0.0
        %631 = vmatpush.xpose.msra.mxu0 0.0
        %632 = vmatpush.xpose.msra.mxu0 0.0
        %633 = vmatpush.xpose.msra.mxu0 0.0
        %634 = vmatpush.xpose.msra.mxu0 0.0
        %635 = vmatpush.xpose.msra.mxu0 0.0
        %636 = vmatpush.xpose.msra.mxu0 0.0
        %637 = vmatpush.xpose.msra.mxu0 0.0
        %638 = vmatpush.xpose.msra.mxu0 0.0
        %639 = vmatpush.xpose.msra.mxu0 %v622
        %640 = vmatmul.f32.gmra.mxu0 %v619
        %v641 = vpop.f32.mrf.mxu0
        %v642 = vadd.f32 0.0, %v641
        %643 = vdwg.mxu0
        %v644 = vmax.f32 %v642, 0.0
        %vm645 = vcmask 64512
        %v647 = vsel %vm645, %v644, 0
        %649 = vmatpush.msra.mxu0 0.0
        %650 = vmatpush.msra.mxu0 0.0
        %651 = vmatpush.msra.mxu0 0.0
        %652 = vmatpush.msra.mxu0 0.0
        %653 = vmatpush.msra.mxu0 0.0
        %654 = vmatpush.msra.mxu0 0.0
        %655 = vmatpush.msra.mxu0 0.0
        %656 = vmatpush.msra.mxu0 0.0
        %657 = vmatpush.msra.mxu0 0.0
        %658 = vmatpush.msra.mxu0 0.0
        %659 = vmatpush.msra.mxu0 0.0
        %660 = vmatpush.msra.mxu0 0.0
        %661 = vmatpush.msra.mxu0 0.0
        %662 = vmatpush.msra.mxu0 0.0
        %663 = vmatpush.msra.mxu0 0.0
        %664 = vmatpush.msra.mxu0 %v616
        %665 = vmatmul.f32.gmra.mxu0 %v647
        %v666 = vpop.f32.mrf.mxu0
        %v667 = vadd.f32 0.0, %v666
        %668 = vdwg.mxu0
        %v669 = vadd.f32 %v529, %v667
        %v670 = vld [vmem:[%s7] sm:$0x1]
        %v671 = vld [vmem:[%s8] sm:$0x1]
        %v672 = vsel %vm538, %v669, 0.0
        %673 = vadd.xlane.f32.xlu0 %v672
        %v674 = vpop.xlane.xlu0 %673
        %v675 = vrcp.pop 32.0
        %v676 = vmul.f32 32.0, %v675
        %v677 = vsub.f32 1.0, %v676
        %v678 = vmul.f32 %v675, %v677
        %v679 = vadd.f32 %v675, %v678
        %vm680 = vweird.f32 %v675
        %v681 = vsel %vm680, %v675, %v679
        %v682 = vmul.f32 %v674, %v681
        %v683 = vsub.f32 %v669, %v682
        %v684 = vmul.f32 %v683, %v683
        %v685 = vsel %vm538, %v684, 0.0
        %686 = vadd.xlane.f32.xlu0 %v685
        %v687 = vpop.xlane.xlu0 %686
        %v688 = vmul.f32 %v687, %v681
        %v689 = vadd.f32 %v688, 1e-05
        %v690 = vrsqrt.pop %v689
        %v691 = vmul.f32 %v690, %v689
        %v692 = vmul.f32 %v691, %v690
        %v693 = vmul.f32 0.5, %v692
        %v694 = vsub.f32 1.5, %v693
        %v695 = vmul.f32 %v690, %v694
        %vm696 = vweird.f32 %v689
        %vm697 = vweird.f32 %v690
        %vm698 = vmor %vm696, %vm697
        %v699 = vsel %vm698, %v690, %v695
        %v700 = vmul.f32 %v683, %v699
        %v702 = vperm.slane %v670, 0
        %v704 = vmul.f32 %v700, %v702
        %v706 = vperm.slane %v671, 0
        %v708 = vadd.f32 %v704, %v706
        %v709 = vld [vmem:[#allocation5] sm:$0xff]
        %v710 = vld [vmem:[#allocation5 + $0x8] sm:$0xff]
        %v711 = vld [vmem:[#allocation5 + $0x10] sm:$0xff]
        %v712 = vld [vmem:[#allocation5 + $0x18] sm:$0xff]
        %v713 = vld [vmem:[%s10] sm:$0x1]
        %v715 = vperm.slane %v713, 0
        %v718 = vsel %vm538, %v708, 0
        %720 = vmatpush.msra.mxu0 0.0
        %721 = vmatpush.msra.mxu0 0.0
        %722 = vmatpush.msra.mxu0 0.0
        %723 = vmatpush.msra.mxu0 0.0
        %724 = vmatpush.msra.mxu0 0.0
        %725 = vmatpush.msra.mxu0 0.0
        %726 = vmatpush.msra.mxu0 0.0
        %727 = vmatpush.msra.mxu0 0.0
        %728 = vmatpush.msra.mxu0 0.0
        %729 = vmatpush.msra.mxu0 0.0
        %730 = vmatpush.msra.mxu0 0.0
        %731 = vmatpush.msra.mxu0 0.0
        %732 = vmatpush.msra.mxu0 %v712
        %733 = vmatpush.msra.mxu0 %v711
        %734 = vmatpush.msra.mxu0 %v710
        %735 = vmatpush.msra.mxu0 %v709
        %736 = vmatmul.f32.gmra.mxu0 %v718
        %v737 = vpop.f32.mrf.mxu0
        %v738 = vadd.f32 %v715, %v737
        %739 = vdwg.mxu0
        %v740 = vmax.f32 %v738, 0.0
        %v741 = vld [vmem:[%s11] sm:$0xff]
        %v742 = vld [vmem:[%s11 + $0x8] sm:$0xff]
        %v743 = vld [vmem:[%s11 + $0x10] sm:$0xff]
        %v744 = vld [vmem:[%s11 + $0x18] sm:$0xff]
        %v745 = vld [vmem:[%s11 + $0x20] sm:$0xff]
        %v746 = vld [vmem:[%s11 + $0x28] sm:$0xff]
        %v747 = vld [vmem:[%s11 + $0x30] sm:$0xff]
        %v748 = vld [vmem:[%s11 + $0x38] sm:$0xff]
        %v749 = vld [vmem:[%s12] sm:$0x1]
        %v751 = vperm.slane %v749, 0
        %vm753 = vcmask 523264
        %v755 = vsel %vm753, %v740, 0
        %757 = vmatpush.msra.mxu0 0.0
        %758 = vmatpush.msra.mxu0 0.0
        %759 = vmatpush.msra.mxu0 0.0
        %760 = vmatpush.msra.mxu0 0.0
        %761 = vmatpush.msra.mxu0 0.0
        %762 = vmatpush.msra.mxu0 0.0
        %763 = vmatpush.msra.mxu0 0.0
        %764 = vmatpush.msra.mxu0 0.0
        %765 = vmatpush.msra.mxu0 %v748
        %766 = vmatpush.msra.mxu0 %v747
        %767 = vmatpush.msra.mxu0 %v746
        %768 = vmatpush.msra.mxu0 %v745
        %769 = vmatpush.msra.mxu0 %v744
        %770 = vmatpush.msra.mxu0 %v743
        %771 = vmatpush.msra.mxu0 %v742
        %772 = vmatpush.msra.mxu0 %v741
        %773 = vmatmul.f32.gmra.mxu0 %v755
        %v774 = vpop.f32.mrf.mxu0
        %v775 = vadd.f32 %v751, %v774
        %776 = vdwg.mxu0
        %v777 = vadd.f32 %v708, %v775
        %v778 = vld [vmem:[%s13] sm:$0x1]
        %v779 = vld [vmem:[%s14] sm:$0x1]
        %v780 = vsel %vm538, %v777, 0.0
        %781 = vadd.xlane.f32.xlu0 %v780
        %v782 = vpop.xlane.xlu0 %781
        %v783 = vmul.f32 %v782, %v681
        %v784 = vsub.f32 %v777, %v783
        %v785 = vmul.f32 %v784, %v784
        %v786 = vsel %vm538, %v785, 0.0
        %787 = vadd.xlane.f32.xlu0 %v786
        %v788 = vpop.xlane.xlu0 %787
        %v789 = vmul.f32 %v788, %v681
        %v790 = vadd.f32 %v789, 1e-05
        %v791 = vrsqrt.pop %v790
        %v792 = vmul.f32 %v791, %v790
        %v793 = vmul.f32 %v792, %v791
        %v794 = vmul.f32 0.5, %v793
        %v795 = vsub.f32 1.5, %v794
        %v796 = vmul.f32 %v791, %v795
        %vm797 = vweird.f32 %v790
        %vm798 = vweird.f32 %v791
        %vm799 = vmor %vm797, %vm798
        %v800 = vsel %vm799, %v791, %v796
        %v801 = vmul.f32 %v784, %v800
        %v803 = vperm.slane %v778, 0
        %v805 = vmul.f32 %v801, %v803
        %v807 = vperm.slane %v779, 0
        %v809 = vadd.f32 %v805, %v807
        %810 = vst.msk [vmem:[%s528] sm:$0xff] %vm538, %v809
        %s811 = sand.u32 %s361, 1
        %s812 = scalar_lea.sflag [#allocation4], %s811
        %s813 = sand.u32 %s361, 1
        %s814 = smul.addr %s813, 8
        %s815 = scalar_lea.vmem [#allocation7], %s814
        // Predicated region
        $region89: #{tpu_custom_call.1} parent=79 // pred_check
          %p816 = pneg %p371
        $region90: #{tpu_custom_call.1} parent=79 // pred_check_branch
          %818 = sbr.rel (%p816) target = $region92
        $region91: #{tpu_custom_call.1} parent=79 // pred_region
          %820 = vsyncadd %s812, 0
          %s821 = smul.addr %s33, 8
          %s822 = scalar_lea.hbm %s15, %s821
          %s824 = sshll.u32 %s815, 4
          %s825 = int_to_ptr.vmem [resolvable:$true] %s824
          %s826 = sshll.u32 %s822, 4
          %s827 = int_to_ptr.hbm [resolvable:$true] %s826
          %829 = dma.vmem_to_hbm [thread:$0]  %s825, 128, %s827, %s812
        $region92: #{tpu_custom_call.1} parent=79 // pred_fallthru
          _
      $region80: #{tpu_custom_call.1} parent=5 // pred_fallthru
        _
      %p830 = scmp.le.s32.totalorder 2, %s28
      // Predicated region
      $region93: #{tpu_custom_call.1} parent=5 // pred_check
        %p831 = pneg %p830
      $region94: #{tpu_custom_call.1} parent=5 // pred_check_branch
        %833 = sbr.rel (%p831) target = $region96
      $region95: #{tpu_custom_call.1} parent=5 // pred_region
        %s834 = ssub.s32 %s28, 2
        // Predicated region
        $region97: #{tpu_custom_call.1} parent=95 // pred_check
          %p835 = pneg %p377
        $region98: #{tpu_custom_call.1} parent=95 // pred_check_branch
          %837 = sbr.rel (%p835) target = $region100
        $region99: #{tpu_custom_call.1} parent=95 // pred_region
          %s838 = sand.u32 %s362, 1
          %s839 = scalar_lea.sflag [#allocation4], %s838
          %s840 = sand.u32 %s362, 1
          %s841 = smul.addr %s840, 8
          %s842 = scalar_lea.vmem [#allocation7], %s841
          %844 = dma.done %s839, 128
        $region100: #{tpu_custom_call.1} parent=95 // pred_fallthru
          _
      $region96: #{tpu_custom_call.1} parent=5 // pred_fallthru
        _
    $region6: #{tpu_custom_call.1} parent=1 // loop_footer
      %s32 = sadd.s32 1, %s28
    $region7: #{tpu_custom_call.1} parent=1 // loop_footer_branch
      %27 = sbr.rel target = $region3
    $region8: #{tpu_custom_call.1} parent=1 // loop_exit
      _
    %845 = vsyncpa [#allocation3], 1
    %s846 = scalar_lea.sflag [#allocation3], 1
    %847 = vsyncpa %s846, 1
    %848 = vsyncpa [#allocation6], 1
    %849 = vsyncpa [#allocation4], 1
    %s850 = scalar_lea.sflag [#allocation4], 1
    %851 = vsyncpa %s850, 1

// kernel: tpu_custom_call.1
$region0: #{tpu_custom_call.1}
  #allocation0 [shape = 'u32[]', space=smem, size = 0x4, offset = 0x4, fixed_abs, tag = 'smem constant byte address 0x4 - core index']
  #allocation1 [shape = 'u32[72,128]{1,0:T(1,128)}', space=vmem, size = 0x9000, scoped, tag = 'internal scratch']
  %s0 = inlined_call_operand.hbm [shape: f32[2,8,32], index: 0, kind: input, shape index: {}]
  %s1 = inlined_call_operand.vmem [shape: f32[32,32], index: 1, kind: input, shape index: {}]
  %s2 = inlined_call_operand.vmem [shape: f32[1,32], index: 2, kind: input, shape index: {}]
  %s3 = inlined_call_operand.vmem [shape: f32[32,32], index: 3, kind: input, shape index: {}]
  %s4 = inlined_call_operand.vmem [shape: f32[1,32], index: 4, kind: input, shape index: {}]
  %s5 = inlined_call_operand.vmem [shape: f32[32,32], index: 5, kind: input, shape index: {}]
  %s6 = inlined_call_operand.vmem [shape: f32[1,32], index: 6, kind: input, shape index: {}]
  %s7 = inlined_call_operand.vmem [shape: f32[1,32], index: 7, kind: input, shape index: {}]
  %s8 = inlined_call_operand.vmem [shape: f32[1,32], index: 8, kind: input, shape index: {}]
  %s9 = inlined_call_operand.hbm [shape: f32[32,64], index: 9, kind: input, shape index: {}]
  %s10 = inlined_call_operand.vmem [shape: f32[1,64], index: 10, kind: input, shape index: {}]
  %s11 = inlined_call_operand.vmem [shape: f32[64,32], index: 11, kind: input, shape index: {}]
  %s12 = inlined_call_operand.vmem [shape: f32[1,32], index: 12, kind: input, shape index: {}]
  %s13 = inlined_call_operand.vmem [shape: f32[1,32], index: 13, kind: input, shape index: {}]
  %s14 = inlined_call_operand.vmem [shape: f32[1,32], index: 14, kind: input, shape index: {}]
  %s15 = inlined_call_operand.hbm [shape: f32[2,8,32], index: 15, kind: output, shape index: {}]
  %s16 = sld [smem:[#allocation0]]
  $region101: #{tpu_custom_call.1} parent=0
    _
  %s18 = ssub.s32 1, %s16
  %s19 = scalar_select 0, %s18, %s16
  $region1: #{tpu_custom_call.1} parent=0
    #allocation2 [shape = 'u8[8192]{0}', space=vmem, size = 0x2000, scoped, tag = 'input window, operand 0']
    #allocation3 [shape = 's32[2]{0}', space=sflag, size = 0x8, scoped, tag = 'scoped memory for tpu_custom_call.1']
    #allocation4 [shape = 's32[2]{0}', space=sflag, size = 0x8, scoped, tag = 'scoped memory for tpu_custom_call.1']
    #allocation5 [shape = 'u8[16384]{0}', space=vmem, size = 0x4000, scoped, tag = 'input window, operand 9, single buffered']
    #allocation6 [shape = 's32[1]{0}', space=sflag, size = 0x4, scoped, tag = 'scoped memory for tpu_custom_call.1']
    #allocation7 [shape = 'u8[8192]{0}', space=vmem, size = 0x2000, scoped, tag = 'output window, operand 0']
    %20 = vsyncpa [#allocation3], 0
    %s21 = scalar_lea.sflag [#allocation3], 1
    %22 = vsyncpa %s21, 0
    %23 = vsyncpa [#allocation6], 0
    %24 = vsyncpa [#allocation4], 0
    %s25 = scalar_lea.sflag [#allocation4], 1
    %26 = vsyncpa %s25, 0
    loop: start=0, step=1, limit=4
    $region2: #{tpu_custom_call.1} parent=1 // loop_pre_header
      _
    $region3: #{tpu_custom_call.1} parent=1 // loop_header
      %s28 = sphi 0, %s32
      %p29 = scmp.ge.s32.totalorder %s28, 4
      %s38 = sphi 0, %s40
      %s41 = sphi 0, %s38
      %s42 = sphi 0, %s41
      %s58 = sphi 0, %s42
      %s62 = sphi 0, %s62
      %s64 = sphi 0, %s62
      %s65 = sphi 0, %s64
      %s79 = sphi 0, %s65
      %s83 = sphi 0, %s83
      %s85 = sphi 0, %s83
      %s86 = sphi 0, %s85
      %s100 = sphi 0, %s86
      %s104 = sphi 0, %s104
      %s106 = sphi 0, %s104
      %s107 = sphi 0, %s106
      %s121 = sphi 0, %s107
      %s125 = sphi 0, %s125
      %s127 = sphi 0, %s125
      %s128 = sphi 0, %s127
      %s142 = sphi 0, %s128
      %s146 = sphi 0, %s146
      %s148 = sphi 0, %s146
      %s149 = sphi 0, %s148
      %s163 = sphi 0, %s149
      %s167 = sphi 0, %s167
      %s169 = sphi 0, %s167
      %s170 = sphi 0, %s169
      %s184 = sphi 0, %s170
      %s188 = sphi 0, %s188
      %s190 = sphi 0, %s188
      %s191 = sphi 0, %s190
      %s205 = sphi 0, %s191
      %s209 = sphi 0, %s209
      %s211 = sphi 0, %s209
      %s212 = sphi 0, %s211
      %s226 = sphi 0, %s212
      %s230 = sphi 0, %s230
      %s232 = sphi 0, %s230
      %s233 = sphi 0, %s232
      %s247 = sphi 0, %s233
      %s251 = sphi 0, %s251
      %s253 = sphi 0, %s251
      %s254 = sphi 0, %s253
      %s268 = sphi 0, %s254
      %s272 = sphi 0, %s272
      %s274 = sphi 0, %s272
      %s275 = sphi 0, %s274
      %s289 = sphi 0, %s275
      %s293 = sphi 0, %s293
      %s295 = sphi 0, %s293
      %s296 = sphi 0, %s295
      %s310 = sphi 0, %s296
      %s314 = sphi 0, %s314
      %s316 = sphi 0, %s314
      %s317 = sphi 0, %s316
      %s331 = sphi 0, %s317
      %s335 = sphi 0, %s335
      %s337 = sphi 0, %s335
      %s338 = sphi 0, %s337
      %s352 = sphi 0, %s338
      %s358 = sphi 0, %s360
      %s361 = sphi 0, %s358
      %s362 = sphi 0, %s361
      %s378 = sphi 0, %s362
    $region4: #{tpu_custom_call.1} parent=1 // loop_header_branch
      %31 = sbr.rel (%p29) target = $region8
    $region5: #{tpu_custom_call.1} parent=1 // loop_body
      %s33 = ssub.s32 %s28, 1
      %s34 = ssub.s32 %s28, 2
      %s35 = sadd.s32 %s28, 1
      %s36 = ssub.s32 %s28, %s35
      %p37 = scmp.eq.s32.totalorder %s36, 0
      %s39 = sadd.s32 %s38, 1
      %s40 = scalar_select %p37, %s38, %s39
      %p43 = pneg %p37
      %p44 = scmp.eq.s32.totalorder %s28, 1
      %p45 = por %p43, %p44
      %p46 = scmp.ne.s32.totalorder %s38, %s41
      %p47 = scmp.eq.s32.totalorder %s28, 0
      %p48 = por %p46, %p47
      %p49 = scmp.ne.s32.totalorder %s38, %s41
      %p50 = scmp.eq.s32.totalorder %s33, 1
      %p51 = por %p49, %p50
      %p52 = scmp.ne.s32.totalorder %s41, %s42
      %p53 = scmp.eq.s32.totalorder %s33, 0
      %p54 = por %p52, %p53
      %p55 = scmp.ne.s32.totalorder %s41, %s42
      %p56 = scmp.eq.s32.totalorder %s34, 1
      %p57 = por %p55, %p56
      %p59 = scmp.ne.s32.totalorder %s42, %s58
      %p60 = scmp.eq.s32.totalorder %s34, 0
      %p61 = por %p59, %p60
      %s63 = sadd.s32 %s62, 1
      %p66 = scmp.eq.s32.totalorder %s28, 1
      %p67 = scmp.ne.s32.totalorder %s62, %s64
      %p68 = scmp.eq.s32.totalorder %s28, 0
      %p69 = por %p67, %p68
      %p70 = scmp.ne.s32.totalorder %s62, %s64
      %p71 = scmp.eq.s32.totalorder %s33, 1
      %p72 = por %p70, %p71
      %p73 = scmp.ne.s32.totalorder %s64, %s65
      %p74 = scmp.eq.s32.totalorder %s33, 0
      %p75 = por %p73, %p74
      %p76 = scmp.ne.s32.totalorder %s64, %s65
      %p77 = scmp.eq.s32.totalorder %s34, 1
      %p78 = por %p76, %p77
      %p80 = scmp.ne.s32.totalorder %s65, %s79
      %p81 = scmp.eq.s32.totalorder %s34, 0
      %p82 = por %p80, %p81
      %s84 = sadd.s32 %s83, 1
      %p87 = scmp.eq.s32.totalorder %s28, 1
      %p88 = scmp.ne.s32.totalorder %s83, %s85
      %p89 = scmp.eq.s32.totalorder %s28, 0
      %p90 = por %p88, %p89
      %p91 = scmp.ne.s32.totalorder %s83, %s85
      %p92 = scmp.eq.s32.totalorder %s33, 1
      %p93 = por %p91, %p92
      %p94 = scmp.ne.s32.totalorder %s85, %s86
      %p95 = scmp.eq.s32.totalorder %s33, 0
      %p96 = por %p94, %p95
      %p97 = scmp.ne.s32.totalorder %s85, %s86
      %p98 = scmp.eq.s32.totalorder %s34, 1
      %p99 = por %p97, %p98
      %p101 = scmp.ne.s32.totalorder %s86, %s100
      %p102 = scmp.eq.s32.totalorder %s34, 0
      %p103 = por %p101, %p102
      %s105 = sadd.s32 %s104, 1
      %p108 = scmp.eq.s32.totalorder %s28, 1
      %p109 = scmp.ne.s32.totalorder %s104, %s106
      %p110 = scmp.eq.s32.totalorder %s28, 0
      %p111 = por %p109, %p110
      %p112 = scmp.ne.s32.totalorder %s104, %s106
      %p113 = scmp.eq.s32.totalorder %s33, 1
      %p114 = por %p112, %p113
      %p115 = scmp.ne.s32.totalorder %s106, %s107
      %p116 = scmp.eq.s32.totalorder %s33, 0
      %p117 = por %p115, %p116
      %p118 = scmp.ne.s32.totalorder %s106, %s107
      %p119 = scmp.eq.s32.totalorder %s34, 1
      %p120 = por %p118, %p119
      %p122 = scmp.ne.s32.totalorder %s107, %s121
      %p123 = scmp.eq.s32.totalorder %s34, 0
      %p124 = por %p122, %p123
      %s126 = sadd.s32 %s125, 1
      %p129 = scmp.eq.s32.totalorder %s28, 1
      %p130 = scmp.ne.s32.totalorder %s125, %s127
      %p131 = scmp.eq.s32.totalorder %s28, 0
      %p132 = por %p130, %p131
      %p133 = scmp.ne.s32.totalorder %s125, %s127
      %p134 = scmp.eq.s32.totalorder %s33, 1
      %p135 = por %p133, %p134
      %p136 = scmp.ne.s32.totalorder %s127, %s128
      %p137 = scmp.eq.s32.totalorder %s33, 0
      %p138 = por %p136, %p137
      %p139 = scmp.ne.s32.totalorder %s127, %s128
      %p140 = scmp.eq.s32.totalorder %s34, 1
      %p141 = por %p139, %p140
      %p143 = scmp.ne.s32.totalorder %s128, %s142
      %p144 = scmp.eq.s32.totalorder %s34, 0
      %p145 = por %p143, %p144
      %s147 = sadd.s32 %s146, 1
      %p150 = scmp.eq.s32.totalorder %s28, 1
      %p151 = scmp.ne.s32.totalorder %s146, %s148
      %p152 = scmp.eq.s32.totalorder %s28, 0
      %p153 = por %p151, %p152
      %p154 = scmp.ne.s32.totalorder %s146, %s148
      %p155 = scmp.eq.s32.totalorder %s33, 1
      %p156 = por %p154, %p155
      %p157 = scmp.ne.s32.totalorder %s148, %s149
      %p158 = scmp.eq.s32.totalorder %s33, 0
      %p159 = por %p157, %p158
      %p160 = scmp.ne.s32.totalorder %s148, %s149
      %p161 = scmp.eq.s32.totalorder %s34, 1
      %p162 = por %p160, %p161
      %p164 = scmp.ne.s32.totalorder %s149, %s163
      %p165 = scmp.eq.s32.totalorder %s34, 0
      %p166 = por %p164, %p165
      %s168 = sadd.s32 %s167, 1
      %p171 = scmp.eq.s32.totalorder %s28, 1
      %p172 = scmp.ne.s32.totalorder %s167, %s169
      %p173 = scmp.eq.s32.totalorder %s28, 0
      %p174 = por %p172, %p173
      %p175 = scmp.ne.s32.totalorder %s167, %s169
      %p176 = scmp.eq.s32.totalorder %s33, 1
      %p177 = por %p175, %p176
      %p178 = scmp.ne.s32.totalorder %s169, %s170
      %p179 = scmp.eq.s32.totalorder %s33, 0
      %p180 = por %p178, %p179
      %p181 = scmp.ne.s32.totalorder %s169, %s170
      %p182 = scmp.eq.s32.totalorder %s34, 1
      %p183 = por %p181, %p182
      %p185 = scmp.ne.s32.totalorder %s170, %s184
      %p186 = scmp.eq.s32.totalorder %s34, 0
      %p187 = por %p185, %p186
      %s189 = sadd.s32 %s188, 1
      %p192 = scmp.eq.s32.totalorder %s28, 1
      %p193 = scmp.ne.s32.totalorder %s188, %s190
      %p194 = scmp.eq.s32.totalorder %s28, 0
      %p195 = por %p193, %p194
      %p196 = scmp.ne.s32.totalorder %s188, %s190
      %p197 = scmp.eq.s32.totalorder %s33, 1
      %p198 = por %p196, %p197
      %p199 = scmp.ne.s32.totalorder %s190, %s191
      %p200 = scmp.eq.s32.totalorder %s33, 0
      %p201 = por %p199, %p200
      %p202 = scmp.ne.s32.totalorder %s190, %s191
      %p203 = scmp.eq.s32.totalorder %s34, 1
      %p204 = por %p202, %p203
      %p206 = scmp.ne.s32.totalorder %s191, %s205
      %p207 = scmp.eq.s32.totalorder %s34, 0
      %p208 = por %p206, %p207
      %s210 = sadd.s32 %s209, 1
      %p213 = scmp.eq.s32.totalorder %s28, 1
      %p214 = scmp.ne.s32.totalorder %s209, %s211
      %p215 = scmp.eq.s32.totalorder %s28, 0
      %p216 = por %p214, %p215
      %p217 = scmp.ne.s32.totalorder %s209, %s211
      %p218 = scmp.eq.s32.totalorder %s33, 1
      %p219 = por %p217, %p218
      %p220 = scmp.ne.s32.totalorder %s211, %s212
      %p221 = scmp.eq.s32.totalorder %s33, 0
      %p222 = por %p220, %p221
      %p223 = scmp.ne.s32.totalorder %s211, %s212
      %p224 = scmp.eq.s32.totalorder %s34, 1
      %p225 = por %p223, %p224
      %p227 = scmp.ne.s32.totalorder %s212, %s226
      %p228 = scmp.eq.s32.totalorder %s34, 0
      %p229 = por %p227, %p228
      %s231 = sadd.s32 %s230, 1
      %p234 = scmp.eq.s32.totalorder %s28, 1
      %p235 = scmp.ne.s32.totalorder %s230, %s232
      %p236 = scmp.eq.s32.totalorder %s28, 0
      %p237 = por %p235, %p236
      %p238 = scmp.ne.s32.totalorder %s230, %s232
      %p239 = scmp.eq.s32.totalorder %s33, 1
      %p240 = por %p238, %p239
      %p241 = scmp.ne.s32.totalorder %s232, %s233
      %p242 = scmp.eq.s32.totalorder %s33, 0
      %p243 = por %p241, %p242
      %p244 = scmp.ne.s32.totalorder %s232, %s233
      %p245 = scmp.eq.s32.totalorder %s34, 1
      %p246 = por %p244, %p245
      %p248 = scmp.ne.s32.totalorder %s233, %s247
      %p249 = scmp.eq.s32.totalorder %s34, 0
      %p250 = por %p248, %p249
      %s252 = sadd.s32 %s251, 1
      %p255 = scmp.eq.s32.totalorder %s28, 1
      %p256 = scmp.ne.s32.totalorder %s251, %s253
      %p257 = scmp.eq.s32.totalorder %s28, 0
      %p258 = por %p256, %p257
      %p259 = scmp.ne.s32.totalorder %s251, %s253
      %p260 = scmp.eq.s32.totalorder %s33, 1
      %p261 = por %p259, %p260
      %p262 = scmp.ne.s32.totalorder %s253, %s254
      %p263 = scmp.eq.s32.totalorder %s33, 0
      %p264 = por %p262, %p263
      %p265 = scmp.ne.s32.totalorder %s253, %s254
      %p266 = scmp.eq.s32.totalorder %s34, 1
      %p267 = por %p265, %p266
      %p269 = scmp.ne.s32.totalorder %s254, %s268
      %p270 = scmp.eq.s32.totalorder %s34, 0
      %p271 = por %p269, %p270
      %s273 = sadd.s32 %s272, 1
      %p276 = scmp.eq.s32.totalorder %s28, 1
      %p277 = scmp.ne.s32.totalorder %s272, %s274
      %p278 = scmp.eq.s32.totalorder %s28, 0
      %p279 = por %p277, %p278
      %p280 = scmp.ne.s32.totalorder %s272, %s274
      %p281 = scmp.eq.s32.totalorder %s33, 1
      %p282 = por %p280, %p281
      %p283 = scmp.ne.s32.totalorder %s274, %s275
      %p284 = scmp.eq.s32.totalorder %s33, 0
      %p285 = por %p283, %p284
      %p286 = scmp.ne.s32.totalorder %s274, %s275
      %p287 = scmp.eq.s32.totalorder %s34, 1
      %p288 = por %p286, %p287
      %p290 = scmp.ne.s32.totalorder %s275, %s289
      %p291 = scmp.eq.s32.totalorder %s34, 0
      %p292 = por %p290, %p291
      %s294 = sadd.s32 %s293, 1
      %p297 = scmp.eq.s32.totalorder %s28, 1
      %p298 = scmp.ne.s32.totalorder %s293, %s295
      %p299 = scmp.eq.s32.totalorder %s28, 0
      %p300 = por %p298, %p299
      %p301 = scmp.ne.s32.totalorder %s293, %s295
      %p302 = scmp.eq.s32.totalorder %s33, 1
      %p303 = por %p301, %p302
      %p304 = scmp.ne.s32.totalorder %s295, %s296
      %p305 = scmp.eq.s32.totalorder %s33, 0
      %p306 = por %p304, %p305
      %p307 = scmp.ne.s32.totalorder %s295, %s296
      %p308 = scmp.eq.s32.totalorder %s34, 1
      %p309 = por %p307, %p308
      %p311 = scmp.ne.s32.totalorder %s296, %s310
      %p312 = scmp.eq.s32.totalorder %s34, 0
      %p313 = por %p311, %p312
      %s315 = sadd.s32 %s314, 1
      %p318 = scmp.eq.s32.totalorder %s28, 1
      %p319 = scmp.ne.s32.totalorder %s314, %s316
      %p320 = scmp.eq.s32.totalorder %s28, 0
      %p321 = por %p319, %p320
      %p322 = scmp.ne.s32.totalorder %s314, %s316
      %p323 = scmp.eq.s32.totalorder %s33, 1
      %p324 = por %p322, %p323
      %p325 = scmp.ne.s32.totalorder %s316, %s317
      %p326 = scmp.eq.s32.totalorder %s33, 0
      %p327 = por %p325, %p326
      %p328 = scmp.ne.s32.totalorder %s316, %s317
      %p329 = scmp.eq.s32.totalorder %s34, 1
      %p330 = por %p328, %p329
      %p332 = scmp.ne.s32.totalorder %s317, %s331
      %p333 = scmp.eq.s32.totalorder %s34, 0
      %p334 = por %p332, %p333
      %s336 = sadd.s32 %s335, 1
      %p339 = scmp.eq.s32.totalorder %s28, 1
      %p340 = scmp.ne.s32.totalorder %s335, %s337
      %p341 = scmp.eq.s32.totalorder %s28, 0
      %p342 = por %p340, %p341
      %p343 = scmp.ne.s32.totalorder %s335, %s337
      %p344 = scmp.eq.s32.totalorder %s33, 1
      %p345 = por %p343, %p344
      %p346 = scmp.ne.s32.totalorder %s337, %s338
      %p347 = scmp.eq.s32.totalorder %s33, 0
      %p348 = por %p346, %p347
      %p349 = scmp.ne.s32.totalorder %s337, %s338
      %p350 = scmp.eq.s32.totalorder %s34, 1
      %p351 = por %p349, %p350
      %p353 = scmp.ne.s32.totalorder %s338, %s352
      %p354 = scmp.eq.s32.totalorder %s34, 0
      %p355 = por %p353, %p354
      %s356 = ssub.s32 %s28, %s35
      %p357 = scmp.eq.s32.totalorder %s356, 0
      %s359 = sadd.s32 %s358, 1
      %s360 = scalar_select %p357, %s358, %s359
      %p363 = pneg %p357
      %p364 = scmp.eq.s32.totalorder %s28, 1
      %p365 = por %p363, %p364
      %p366 = scmp.ne.s32.totalorder %s358, %s361
      %p367 = scmp.eq.s32.totalorder %s28, 0
      %p368 = por %p366, %p367
      %p369 = scmp.ne.s32.totalorder %s358, %s361
      %p370 = scmp.eq.s32.totalorder %s33, 1
      %p371 = por %p369, %p370
      %p372 = scmp.ne.s32.totalorder %s361, %s362
      %p373 = scmp.eq.s32.totalorder %s33, 0
      %p374 = por %p372, %p373
      %p375 = scmp.ne.s32.totalorder %s361, %s362
      %p376 = scmp.eq.s32.totalorder %s34, 1
      %p377 = por %p375, %p376
      %p379 = scmp.ne.s32.totalorder %s362, %s378
      %p380 = scmp.eq.s32.totalorder %s34, 0
      %p381 = por %p379, %p380
      %p382 = scmp.le.s32.totalorder 1, %s28
      %p383 = scmp.lt.s32.totalorder %s28, 3
      %p384 = pnand %p382, %p383
      %p385 = pneg %p384
      // Predicated region
      $region9: #{tpu_custom_call.1} parent=5 // pred_check
        _
      $region10: #{tpu_custom_call.1} parent=5 // pred_check_branch
        %387 = sbr.rel (%p384) target = $region12
      $region11: #{tpu_custom_call.1} parent=5 // pred_region
        %s388 = ssub.s32 %s28, 1
        // Predicated region
        $region13: #{tpu_custom_call.1} parent=11 // pred_check
          %p389 = pneg %p75
        $region14: #{tpu_custom_call.1} parent=11 // pred_check_branch
          %391 = sbr.rel (%p389) target = $region16
        $region15: #{tpu_custom_call.1} parent=11 // pred_region
          _
        $region16: #{tpu_custom_call.1} parent=11 // pred_fallthru
          _
        // Predicated region
        $region17: #{tpu_custom_call.1} parent=11 // pred_check
          %p392 = pneg %p96
        $region18: #{tpu_custom_call.1} parent=11 // pred_check_branch
          %394 = sbr.rel (%p392) target = $region20
        $region19: #{tpu_custom_call.1} parent=11 // pred_region
          _
        $region20: #{tpu_custom_call.1} parent=11 // pred_fallthru
          _
        // Predicated region
        $region21: #{tpu_custom_call.1} parent=11 // pred_check
          %p395 = pneg %p117
        $region22: #{tpu_custom_call.1} parent=11 // pred_check_branch
          %397 = sbr.rel (%p395) target = $region24
        $region23: #{tpu_custom_call.1} parent=11 // pred_region
          _
        $region24: #{tpu_custom_call.1} parent=11 // pred_fallthru
          _
        // Predicated region
        $region25: #{tpu_custom_call.1} parent=11 // pred_check
          %p398 = pneg %p138
        $region26: #{tpu_custom_call.1} parent=11 // pred_check_branch
          %400 = sbr.rel (%p398) target = $region28
        $region27: #{tpu_custom_call.1} parent=11 // pred_region
          _
        $region28: #{tpu_custom_call.1} parent=11 // pred_fallthru
          _
        // Predicated region
        $region29: #{tpu_custom_call.1} parent=11 // pred_check
          %p401 = pneg %p159
        $region30: #{tpu_custom_call.1} parent=11 // pred_check_branch
          %403 = sbr.rel (%p401) target = $region32
        $region31: #{tpu_custom_call.1} parent=11 // pred_region
          _
        $region32: #{tpu_custom_call.1} parent=11 // pred_fallthru
          _
        // Predicated region
        $region33: #{tpu_custom_call.1} parent=11 // pred_check
          %p404 = pneg %p180
        $region34: #{tpu_custom_call.1} parent=11 // pred_check_branch
          %406 = sbr.rel (%p404) target = $region36
        $region35: #{tpu_custom_call.1} parent=11 // pred_region
          _
        $region36: #{tpu_custom_call.1} parent=11 // pred_fallthru
          _
        // Predicated region
        $region37: #{tpu_custom_call.1} parent=11 // pred_check
          %p407 = pneg %p201
        $region38: #{tpu_custom_call.1} parent=11 // pred_check_branch
          %409 = sbr.rel (%p407) target = $region40
        $region39: #{tpu_custom_call.1} parent=11 // pred_region
          _
        $region40: #{tpu_custom_call.1} parent=11 // pred_fallthru
          _
        // Predicated region
        $region41: #{tpu_custom_call.1} parent=11 // pred_check
          %p410 = pneg %p222
        $region42: #{tpu_custom_call.1} parent=11 // pred_check_branch
          %412 = sbr.rel (%p410) target = $region44
        $region43: #{tpu_custom_call.1} parent=11 // pred_region
          _
        $region44: #{tpu_custom_call.1} parent=11 // pred_fallthru
          _
        // Predicated region
        $region45: #{tpu_custom_call.1} parent=11 // pred_check
          %p413 = pneg %p243
        $region46: #{tpu_custom_call.1} parent=11 // pred_check_branch
          %415 = sbr.rel (%p413) target = $region48
        $region47: #{tpu_custom_call.1} parent=11 // pred_region
          %417 = vsyncadd [#allocation6], 0
          %s418 = sshll.u32 %s9, 4
          %s419 = int_to_ptr.hbm [resolvable:$true] %s418
          %s420 = sshll.u32 [#allocation5], 4
          %s421 = int_to_ptr.vmem [resolvable:$true] %s420
          %426 = dma.hbm_to_vmem [thread:$0]  %s419, 512, %s421, [#allocation6], 128, 128, 8
        $region48: #{tpu_custom_call.1} parent=11 // pred_fallthru
          _
        // Predicated region
        $region49: #{tpu_custom_call.1} parent=11 // pred_check
          %p427 = pneg %p264
        $region50: #{tpu_custom_call.1} parent=11 // pred_check_branch
          %429 = sbr.rel (%p427) target = $region52
        $region51: #{tpu_custom_call.1} parent=11 // pred_region
          _
        $region52: #{tpu_custom_call.1} parent=11 // pred_fallthru
          _
        // Predicated region
        $region53: #{tpu_custom_call.1} parent=11 // pred_check
          %p430 = pneg %p285
        $region54: #{tpu_custom_call.1} parent=11 // pred_check_branch
          %432 = sbr.rel (%p430) target = $region56
        $region55: #{tpu_custom_call.1} parent=11 // pred_region
          _
        $region56: #{tpu_custom_call.1} parent=11 // pred_fallthru
          _
        // Predicated region
        $region57: #{tpu_custom_call.1} parent=11 // pred_check
          %p433 = pneg %p306
        $region58: #{tpu_custom_call.1} parent=11 // pred_check_branch
          %435 = sbr.rel (%p433) target = $region60
        $region59: #{tpu_custom_call.1} parent=11 // pred_region
          _
        $region60: #{tpu_custom_call.1} parent=11 // pred_fallthru
          _
        // Predicated region
        $region61: #{tpu_custom_call.1} parent=11 // pred_check
          %p436 = pneg %p327
        $region62: #{tpu_custom_call.1} parent=11 // pred_check_branch
          %438 = sbr.rel (%p436) target = $region64
        $region63: #{tpu_custom_call.1} parent=11 // pred_region
          _
        $region64: #{tpu_custom_call.1} parent=11 // pred_fallthru
          _
        // Predicated region
        $region65: #{tpu_custom_call.1} parent=11 // pred_check
          %p439 = pneg %p348
        $region66: #{tpu_custom_call.1} parent=11 // pred_check_branch
          %441 = sbr.rel (%p439) target = $region68
        $region67: #{tpu_custom_call.1} parent=11 // pred_region
          _
        $region68: #{tpu_custom_call.1} parent=11 // pred_fallthru
          _
      $region12: #{tpu_custom_call.1} parent=5 // pred_fallthru
        _
      %p442 = scmp.lt.s32.totalorder %s28, 2
      // Predicated region
      $region69: #{tpu_custom_call.1} parent=5 // pred_check
        %p443 = pneg %p442
      $region70: #{tpu_custom_call.1} parent=5 // pred_check_branch
        %445 = sbr.rel (%p443) target = $region72
      $region71: #{tpu_custom_call.1} parent=5 // pred_region
        // Predicated region
        $region73: #{tpu_custom_call.1} parent=71 // pred_check
          %p446 = pneg %p48
        $region74: #{tpu_custom_call.1} parent=71 // pred_check_branch
          %448 = sbr.rel (%p446) target = $region76
        $region75: #{tpu_custom_call.1} parent=71 // pred_region
          %s449 = sand.u32 %s38, 1
          %s450 = scalar_lea.sflag [#allocation3], %s449
          %s451 = sand.u32 %s38, 1
          %s452 = smul.addr %s451, 8
          %s453 = scalar_lea.vmem [#allocation2], %s452
          %455 = vsyncadd %s450, 0
          %s456 = smul.addr %s28, 8
          %s457 = scalar_lea.hbm %s0, %s456
          %s459 = sshll.u32 %s457, 4
          %s460 = int_to_ptr.hbm [resolvable:$true] %s459
          %s461 = sshll.u32 %s453, 4
          %s462 = int_to_ptr.vmem [resolvable:$true] %s461
          %464 = dma.hbm_to_vmem [thread:$0]  %s460, 128, %s462, %s450
        $region76: #{tpu_custom_call.1} parent=71 // pred_fallthru
          _
      $region72: #{tpu_custom_call.1} parent=5 // pred_fallthru
        _
      %p465 = scmp.le.s32.totalorder 1, %s28
      %p466 = scmp.lt.s32.totalorder %s28, 3
      %p467 = pnand %p465, %p466
      %p468 = pneg %p467
      // Predicated region
      $region77: #{tpu_custom_call.1} parent=5 // pred_check
        _
      $region78: #{tpu_custom_call.1} parent=5 // pred_check_branch
        %470 = sbr.rel (%p467) target = $region80
      $region79: #{tpu_custom_call.1} parent=5 // pred_region
        %s471 = ssub.s32 %s28, 1
        %s472 = sand.u32 %s41, 1
        %s473 = scalar_lea.sflag [#allocation3], %s472
        %s474 = sand.u32 %s41, 1
        %s475 = smul.addr %s474, 8
        %s476 = scalar_lea.vmem [#allocation2], %s475
        // Predicated region
        $region81: #{tpu_custom_call.1} parent=79 // pred_check
          %p477 = pneg %p54
        $region82: #{tpu_custom_call.1} parent=79 // pred_check_branch
          %479 = sbr.rel (%p477) target = $region84
        $region83: #{tpu_custom_call.1} parent=79 // pred_region
          %481 = dma.done %s473, 128
        $region84: #{tpu_custom_call.1} parent=79 // pred_fallthru
          _
        // Predicated region
        $region85: #{tpu_custom_call.1} parent=79 // pred_check
          %p482 = pneg %p243
        $region86: #{tpu_custom_call.1} parent=79 // pred_check_branch
          %484 = sbr.rel (%p482) target = $region88
        $region87: #{tpu_custom_call.1} parent=79 // pred_region
          %486 = dma.done [#allocation6], 512
        $region88: #{tpu_custom_call.1} parent=79 // pred_fallthru
          _
        %s487 = sand.u32 %s41, 1
        %s488 = scalar_lea.sflag [#allocation3], %s487
        %s489 = sand.u32 %s41, 1
        %s490 = smul.addr %s489, 8
        %s491 = scalar_lea.vmem [#allocation2], %s490
        %p492 = pneg %p54
        %p493 = pneg %p51
        %p494 = pneg %p75
        %p495 = pneg %p72
        %p496 = pneg %p96
        %p497 = pneg %p93
        %p498 = pneg %p117
        %p499 = pneg %p114
        %p500 = pneg %p138
        %p501 = pneg %p135
        %p502 = pneg %p159
        %p503 = pneg %p156
        %p504 = pneg %p180
        %p505 = pneg %p177
        %p506 = pneg %p201
        %p507 = pneg %p198
        %p508 = pneg %p222
        %p509 = pneg %p219
        %p510 = pneg %p243
        %p511 = pneg %p240
        %p512 = pneg %p264
        %p513 = pneg %p261
        %p514 = pneg %p285
        %p515 = pneg %p282
        %p516 = pneg %p306
        %p517 = pneg %p303
        %p518 = pneg %p327
        %p519 = pneg %p324
        %p520 = pneg %p348
        %p521 = pneg %p345
        %p522 = pneg %p374
        %p523 = pneg %p371
        %s524 = sand.u32 %s361, 1
        %s525 = scalar_lea.sflag [#allocation4], %s524
        %s526 = sand.u32 %s361, 1
        %s527 = smul.addr %s526, 8
        %s528 = scalar_lea.vmem [#allocation7], %s527
        %v529 = vld [vmem:[%s476] sm:$0xff]
        %v530 = vld [vmem:[%s1] sm:$0xff]
        %v531 = vld [vmem:[%s1 + $0x8] sm:$0xff]
        %v532 = vld [vmem:[%s1 + $0x10] sm:$0xff]
        %v533 = vld [vmem:[%s1 + $0x18] sm:$0xff]
        %v534 = vld [vmem:[%s2] sm:$0x1]
        %v536 = vperm.slane %v534, 0
        %vm538 = vcmask 261120
        %v540 = vsel %vm538, %v529, 0
        %542 = vmatpush.msra.mxu0 0.0
        %543 = vmatpush.msra.mxu0 0.0
        %544 = vmatpush.msra.mxu0 0.0
        %545 = vmatpush.msra.mxu0 0.0
        %546 = vmatpush.msra.mxu0 0.0
        %547 = vmatpush.msra.mxu0 0.0
        %548 = vmatpush.msra.mxu0 0.0
        %549 = vmatpush.msra.mxu0 0.0
        %550 = vmatpush.msra.mxu0 0.0
        %551 = vmatpush.msra.mxu0 0.0
        %552 = vmatpush.msra.mxu0 0.0
        %553 = vmatpush.msra.mxu0 0.0
        %554 = vmatpush.msra.mxu0 %v533
        %555 = vmatpush.msra.mxu0 %v532
        %556 = vmatpush.msra.mxu0 %v531
        %557 = vmatpush.msra.mxu0 %v530
        %558 = vmatmul.f32.gmra.mxu0 %v540
        %v559 = vpop.f32.mrf.mxu0
        %v560 = vadd.f32 %v536, %v559
        %561 = vdwg.mxu0
        %v562 = vld [vmem:[%s3] sm:$0xff]
        %v563 = vld [vmem:[%s3 + $0x8] sm:$0xff]
        %v564 = vld [vmem:[%s3 + $0x10] sm:$0xff]
        %v565 = vld [vmem:[%s3 + $0x18] sm:$0xff]
        %v566 = vld [vmem:[%s4] sm:$0x1]
        %v568 = vperm.slane %v566, 0
        %570 = vmatpush.msra.mxu0 0.0
        %571 = vmatpush.msra.mxu0 0.0
        %572 = vmatpush.msra.mxu0 0.0
        %573 = vmatpush.msra.mxu0 0.0
        %574 = vmatpush.msra.mxu0 0.0
        %575 = vmatpush.msra.mxu0 0.0
        %576 = vmatpush.msra.mxu0 0.0
        %577 = vmatpush.msra.mxu0 0.0
        %578 = vmatpush.msra.mxu0 0.0
        %579 = vmatpush.msra.mxu0 0.0
        %580 = vmatpush.msra.mxu0 0.0
        %581 = vmatpush.msra.mxu0 0.0
        %582 = vmatpush.msra.mxu0 %v565
        %583 = vmatpush.msra.mxu0 %v564
        %584 = vmatpush.msra.mxu0 %v563
        %585 = vmatpush.msra.mxu0 %v562
        %586 = vmatmul.f32.gmra.mxu0 %v540
        %v587 = vpop.f32.mrf.mxu0
        %v588 = vadd.f32 %v568, %v587
        %589 = vdwg.mxu0
        %v590 = vld [vmem:[%s5] sm:$0xff]
        %v591 = vld [vmem:[%s5 + $0x8] sm:$0xff]
        %v592 = vld [vmem:[%s5 + $0x10] sm:$0xff]
        %v593 = vld [vmem:[%s5 + $0x18] sm:$0xff]
        %v594 = vld [vmem:[%s6] sm:$0x1]
        %v596 = vperm.slane %v594, 0
        %598 = vmatpush.msra.mxu0 0.0
        %599 = vmatpush.msra.mxu0 0.0
        %600 = vmatpush.msra.mxu0 0.0
        %601 = vmatpush.msra.mxu0 0.0
        %602 = vmatpush.msra.mxu0 0.0
        %603 = vmatpush.msra.mxu0 0.0
        %604 = vmatpush.msra.mxu0 0.0
        %605 = vmatpush.msra.mxu0 0.0
        %606 = vmatpush.msra.mxu0 0.0
        %607 = vmatpush.msra.mxu0 0.0
        %608 = vmatpush.msra.mxu0 0.0
        %609 = vmatpush.msra.mxu0 0.0
        %610 = vmatpush.msra.mxu0 %v593
        %611 = vmatpush.msra.mxu0 %v592
        %612 = vmatpush.msra.mxu0 %v591
        %613 = vmatpush.msra.mxu0 %v590
        %614 = vmatmul.f32.gmra.mxu0 %v540
        %v615 = vpop.f32.mrf.mxu0
        %v616 = vadd.f32 %v596, %v615
        %617 = vdwg.mxu0
        %v619 = vsel %vm538, %v560, 0
        %v622 = vsel %vm538, %v588, 0
        %624 = vmatpush.xpose.msra.mxu0 0.0
        %625 = vmatpush.xpose.msra.mxu0 0.0
        %626 = vmatpush.xpose.msra.mxu0 0.0
        %627 = vmatpush.xpose.msra.mxu0 0.0
        %628 = vmatpush.xpose.msra.mxu0 0.0
        %629 = vmatpush.xpose.msra.mxu0 0.0
        %630 = vmatpush.xpose.msra.mxu0 0.0
        %631 = vmatpush.xpose.msra.mxu0 0.0
        %632 = vmatpush.xpose.msra.mxu0 0.0
        %633 = vmatpush.xpose.msra.mxu0 0.0
        %634 = vmatpush.xpose.msra.mxu0 0.0
        %635 = vmatpush.xpose.msra.mxu0 0.0
        %636 = vmatpush.xpose.msra.mxu0 0.0
        %637 = vmatpush.xpose.msra.mxu0 0.0
        %638 = vmatpush.xpose.msra.mxu0 0.0
        %639 = vmatpush.xpose.msra.mxu0 %v622
        %640 = vmatmul.f32.gmra.mxu0 %v619
        %v641 = vpop.f32.mrf.mxu0
        %v642 = vadd.f32 0.0, %v641
        %643 = vdwg.mxu0
        %v644 = vmax.f32 %v642, 0.0
        %vm645 = vcmask 64512
        %v647 = vsel %vm645, %v644, 0
        %649 = vmatpush.msra.mxu0 0.0
        %650 = vmatpush.msra.mxu0 0.0
        %651 = vmatpush.msra.mxu0 0.0
        %652 = vmatpush.msra.mxu0 0.0
        %653 = vmatpush.msra.mxu0 0.0
        %654 = vmatpush.msra.mxu0 0.0
        %655 = vmatpush.msra.mxu0 0.0
        %656 = vmatpush.msra.mxu0 0.0
        %657 = vmatpush.msra.mxu0 0.0
        %658 = vmatpush.msra.mxu0 0.0
        %659 = vmatpush.msra.mxu0 0.0
        %660 = vmatpush.msra.mxu0 0.0
        %661 = vmatpush.msra.mxu0 0.0
        %662 = vmatpush.msra.mxu0 0.0
        %663 = vmatpush.msra.mxu0 0.0
        %664 = vmatpush.msra.mxu0 %v616
        %665 = vmatmul.f32.gmra.mxu0 %v647
        %v666 = vpop.f32.mrf.mxu0
        %v667 = vadd.f32 0.0, %v666
        %668 = vdwg.mxu0
        %v669 = vadd.f32 %v529, %v667
        %v670 = vld [vmem:[%s7] sm:$0x1]
        %v671 = vld [vmem:[%s8] sm:$0x1]
        %v672 = vsel %vm538, %v669, 0.0
        %673 = vadd.xlane.f32.xlu0 %v672
        %v674 = vpop.xlane.xlu0 %673
        %v675 = vrcp.pop 32.0
        %v676 = vmul.f32 32.0, %v675
        %v677 = vsub.f32 1.0, %v676
        %v678 = vmul.f32 %v675, %v677
        %v679 = vadd.f32 %v675, %v678
        %vm680 = vweird.f32 %v675
        %v681 = vsel %vm680, %v675, %v679
        %v682 = vmul.f32 %v674, %v681
        %v683 = vsub.f32 %v669, %v682
        %v684 = vmul.f32 %v683, %v683
        %v685 = vsel %vm538, %v684, 0.0
        %686 = vadd.xlane.f32.xlu0 %v685
        %v687 = vpop.xlane.xlu0 %686
        %v688 = vmul.f32 %v687, %v681
        %v689 = vadd.f32 %v688, 1e-05
        %v690 = vrsqrt.pop %v689
        %v691 = vmul.f32 %v690, %v689
        %v692 = vmul.f32 %v691, %v690
        %v693 = vmul.f32 0.5, %v692
        %v694 = vsub.f32 1.5, %v693
        %v695 = vmul.f32 %v690, %v694
        %vm696 = vweird.f32 %v689
        %vm697 = vweird.f32 %v690
        %vm698 = vmor %vm696, %vm697
        %v699 = vsel %vm698, %v690, %v695
        %v700 = vmul.f32 %v683, %v699
        %v702 = vperm.slane %v670, 0
        %v704 = vmul.f32 %v700, %v702
        %v706 = vperm.slane %v671, 0
        %v708 = vadd.f32 %v704, %v706
        %v709 = vld [vmem:[#allocation5] sm:$0xff]
        %v710 = vld [vmem:[#allocation5 + $0x8] sm:$0xff]
        %v711 = vld [vmem:[#allocation5 + $0x10] sm:$0xff]
        %v712 = vld [vmem:[#allocation5 + $0x18] sm:$0xff]
        %v713 = vld [vmem:[%s10] sm:$0x1]
        %v715 = vperm.slane %v713, 0
        %v718 = vsel %vm538, %v708, 0
        %720 = vmatpush.msra.mxu0 0.0
        %721 = vmatpush.msra.mxu0 0.0
        %722 = vmatpush.msra.mxu0 0.0
        %723 = vmatpush.msra.mxu0 0.0
        %724 = vmatpush.msra.mxu0 0.0
        %725 = vmatpush.msra.mxu0 0.0
        %726 = vmatpush.msra.mxu0 0.0
        %727 = vmatpush.msra.mxu0 0.0
        %728 = vmatpush.msra.mxu0 0.0
        %729 = vmatpush.msra.mxu0 0.0
        %730 = vmatpush.msra.mxu0 0.0
        %731 = vmatpush.msra.mxu0 0.0
        %732 = vmatpush.msra.mxu0 %v712
        %733 = vmatpush.msra.mxu0 %v711
        %734 = vmatpush.msra.mxu0 %v710
        %735 = vmatpush.msra.mxu0 %v709
        %736 = vmatmul.f32.gmra.mxu0 %v718
        %v737 = vpop.f32.mrf.mxu0
        %v738 = vadd.f32 %v715, %v737
        %739 = vdwg.mxu0
        %v740 = vmax.f32 %v738, 0.0
        %v741 = vld [vmem:[%s11] sm:$0xff]
        %v742 = vld [vmem:[%s11 + $0x8] sm:$0xff]
        %v743 = vld [vmem:[%s11 + $0x10] sm:$0xff]
        %v744 = vld [vmem:[%s11 + $0x18] sm:$0xff]
        %v745 = vld [vmem:[%s11 + $0x20] sm:$0xff]
        %v746 = vld [vmem:[%s11 + $0x28] sm:$0xff]
        %v747 = vld [vmem:[%s11 + $0x30] sm:$0xff]
        %v748 = vld [vmem:[%s11 + $0x38] sm:$0xff]
        %v749 = vld [vmem:[%s12] sm:$0x1]
        %v751 = vperm.slane %v749, 0
        %vm753 = vcmask 523264
        %v755 = vsel %vm753, %v740, 0
        %757 = vmatpush.msra.mxu0 0.0
        %758 = vmatpush.msra.mxu0 0.0
        %759 = vmatpush.msra.mxu0 0.0
        %760 = vmatpush.msra.mxu0 0.0
        %761 = vmatpush.msra.mxu0 0.0
        %762 = vmatpush.msra.mxu0 0.0
        %763 = vmatpush.msra.mxu0 0.0
        %764 = vmatpush.msra.mxu0 0.0
        %765 = vmatpush.msra.mxu0 %v748
        %766 = vmatpush.msra.mxu0 %v747
        %767 = vmatpush.msra.mxu0 %v746
        %768 = vmatpush.msra.mxu0 %v745
        %769 = vmatpush.msra.mxu0 %v744
        %770 = vmatpush.msra.mxu0 %v743
        %771 = vmatpush.msra.mxu0 %v742
        %772 = vmatpush.msra.mxu0 %v741
        %773 = vmatmul.f32.gmra.mxu0 %v755
        %v774 = vpop.f32.mrf.mxu0
        %v775 = vadd.f32 %v751, %v774
        %776 = vdwg.mxu0
        %v777 = vadd.f32 %v708, %v775
        %v778 = vld [vmem:[%s13] sm:$0x1]
        %v779 = vld [vmem:[%s14] sm:$0x1]
        %v780 = vsel %vm538, %v777, 0.0
        %781 = vadd.xlane.f32.xlu0 %v780
        %v782 = vpop.xlane.xlu0 %781
        %v783 = vmul.f32 %v782, %v681
        %v784 = vsub.f32 %v777, %v783
        %v785 = vmul.f32 %v784, %v784
        %v786 = vsel %vm538, %v785, 0.0
        %787 = vadd.xlane.f32.xlu0 %v786
        %v788 = vpop.xlane.xlu0 %787
        %v789 = vmul.f32 %v788, %v681
        %v790 = vadd.f32 %v789, 1e-05
        %v791 = vrsqrt.pop %v790
        %v792 = vmul.f32 %v791, %v790
        %v793 = vmul.f32 %v792, %v791
        %v794 = vmul.f32 0.5, %v793
        %v795 = vsub.f32 1.5, %v794
        %v796 = vmul.f32 %v791, %v795
        %vm797 = vweird.f32 %v790
        %vm798 = vweird.f32 %v791
        %vm799 = vmor %vm797, %vm798
        %v800 = vsel %vm799, %v791, %v796
        %v801 = vmul.f32 %v784, %v800
        %v803 = vperm.slane %v778, 0
        %v805 = vmul.f32 %v801, %v803
        %v807 = vperm.slane %v779, 0
        %v809 = vadd.f32 %v805, %v807
        %810 = vst.msk [vmem:[%s528] sm:$0xff] %vm538, %v809
        %s811 = sand.u32 %s361, 1
        %s812 = scalar_lea.sflag [#allocation4], %s811
        %s813 = sand.u32 %s361, 1
        %s814 = smul.addr %s813, 8
        %s815 = scalar_lea.vmem [#allocation7], %s814
        // Predicated region
        $region89: #{tpu_custom_call.1} parent=79 // pred_check
          %p816 = pneg %p371
        $region90: #{tpu_custom_call.1} parent=79 // pred_check_branch
          %818 = sbr.rel (%p816) target = $region92
        $region91: #{tpu_custom_call.1} parent=79 // pred_region
          %820 = vsyncadd %s812, 0
          %s821 = smul.addr %s33, 8
          %s822 = scalar_lea.hbm %s15, %s821
          %s824 = sshll.u32 %s815, 4
          %s825 = int_to_ptr.vmem [resolvable:$true] %s824
          %s826 = sshll.u32 %s822, 4
          %s827 = int_to_ptr.hbm [resolvable:$true] %s826
          %829 = dma.vmem_to_hbm [thread:$0]  %s825, 128, %s827, %s812
        $region92: #{tpu_custom_call.1} parent=79 // pred_fallthru
          _
      $region80: #{tpu_custom_call.1} parent=5 // pred_fallthru
        _
      %p830 = scmp.le.s32.totalorder 2, %s28
      // Predicated region
      $region93: #{tpu_custom_call.1} parent=5 // pred_check
        %p831 = pneg %p830
      $region94: #{tpu_custom_call.1} parent=5 // pred_check_branch
        %833 = sbr.rel (%p831) target = $region96
      $region95: #{tpu_custom_call.1} parent=5 // pred_region
        %s834 = ssub.s32 %s28, 2
        // Predicated region
        $region97: #{tpu_custom_call.1} parent=95 // pred_check
          %p835 = pneg %p377
        $region98: #{tpu_custom_call.1} parent=95 // pred_check_branch
          %837 = sbr.rel (%p835) target = $region100
        $region99: #{tpu_custom_call.1} parent=95 // pred_region
          %s838 = sand.u32 %s362, 1
          %s839 = scalar_lea.sflag [#allocation4], %s838
          %s840 = sand.u32 %s362, 1
          %s841 = smul.addr %s840, 8
          %s842 = scalar_lea.vmem [#allocation7], %s841
          %844 = dma.done %s839, 128
        $region100: #{tpu_custom_call.1} parent=95 // pred_fallthru
          _
      $region96: #{tpu_custom_call.1} parent=5 // pred_fallthru
        _
    $region6: #{tpu_custom_call.1} parent=1 // loop_footer
      %s32 = sadd.s32 1, %s28
    $region7: #{tpu_custom_call.1} parent=1 // loop_footer_branch
      %27 = sbr.rel target = $region3
    $region8: #{tpu_custom_call.1} parent=1 // loop_exit
      _
    %845 = vsyncpa [#allocation3], 1
    %s846 = scalar_lea.sflag [#allocation3], 1
    %847 = vsyncpa %s846, 1
    %848 = vsyncpa [#allocation6], 1
    %849 = vsyncpa [#allocation4], 1
    %s850 = scalar_lea.sflag [#allocation4], 1
    %851 = vsyncpa %s850, 1

</llo_original>
